<compile_context>
chip_gen: v6e
topology: v6e:2x2x1
jax: 0.10.0
libtpu: 0.0.40
codegen_flags: <defaults>
</compile_context>

<pallas_src>
import functools

import jax
import jax.numpy as jnp
from jax import lax
from jax.experimental import pallas as pl
from jax.experimental.pallas import tpu as pltpu


def dual_attention_kernel(x_ref,       # (Bp*N, C)   f32
                          w_qk_ref,    # (C, 2*C8)   bf16   [q | k]
                          b_qk_ref,    # (1, 2*C8)   f32    [bq | bk]
                          w_v_ref,     # (C, C)      bf16   gamma * Wv^T
                          b_v_ref,     # (1, C)      f32    gamma * bv
                          w_r_ref,     # (C, C)      bf16   Wp + Wc   (residual path)
                          b_r_ref,     # (1, C)      f32    bf*bn_scale + bn_shift
                          w_p_ref,     # (C, C)      bf16   Wf_pos^T * bn_scale
                          w_c_ref,     # (C, C)      bf16   beta * Wf_ch^T * bn_scale
                          o_ref,       # (Bp*N, C)   f32
                          *, n):
    m, c = x_ref.shape
    bp = m // n
    c8 = w_qk_ref.shape[1] // 2

    x = x_ref[...]                                   # (Bp*N, C) f32
    x_bf = x.astype(jnp.bfloat16)

    # ---- shared-weight projections: single large-M MXU pushes over the packed batch ----
    qk = jnp.dot(x_bf, w_qk_ref[...], preferred_element_type=jnp.float32) + b_qk_ref[...]
    v = jnp.dot(x_bf, w_v_ref[...], preferred_element_type=jnp.float32) + b_v_ref[...]
    # residual "+x" of both attention branches routed through the (BN-scaled) fusion
    # conv, plus all constant bias terms -> one extra K=C push, no (N,C) VPU adds.
    res = jnp.dot(x_bf, w_r_ref[...], preferred_element_type=jnp.float32) + b_r_ref[...]

    q_bf = qk[:, :c8].astype(jnp.bfloat16)           # lane offset 0
    k_bf = qk[:, c8:].astype(jnp.bfloat16)           # lane offset 8 (tiny, aligned enough)
    v_bf = v.astype(jnp.bfloat16)

    # ---- per-batch attentions (Bp is small & static: unrolled) ----
    pos_parts, ch_parts = [], []
    for b in range(bp):
        lo, hi = b * n, (b + 1) * n                  # static sublane-aligned slices
        qb, kb, vb, xb = q_bf[lo:hi], k_bf[lo:hi], v_bf[lo:hi], x_bf[lo:hi]

        # position attention: softmax over keys (last axis)
        e_p = lax.dot_general(qb, kb, (((1,), (1,)), ((), ())),
                              preferred_element_type=jnp.float32)        # (N, N)
        p_p = jnp.exp(e_p - jnp.max(e_p, axis=-1, keepdims=True))
        a_p = (p_p * pl.reciprocal(jnp.sum(p_p, axis=-1, keepdims=True),
                                   approx=True)).astype(jnp.bfloat16)
        pos_parts.append(jnp.dot(a_p, vb, preferred_element_type=jnp.float32))   # (N, C)

        # channel attention: energy is symmetric, so the transposed attention
        # matrix is softmax over axis 0; apply step is the MXU-natural x @ att_c^T.
        # beta is folded into w_c_ref (wrapper), so no extra scaling here.
        e_c = lax.dot_general(xb, xb, (((0,), (0,)), ((), ())),
                              preferred_element_type=jnp.float32)        # (C, C)
        p_c = jnp.exp(e_c - jnp.max(e_c, axis=0, keepdims=True))
        a_ct = (p_c * pl.reciprocal(jnp.sum(p_c, axis=0, keepdims=True),
                                    approx=True)).astype(jnp.bfloat16)
        ch_parts.append(jnp.dot(xb, a_ct, preferred_element_type=jnp.float32))   # (N, C)

    pos = pos_parts[0] if bp == 1 else jnp.concatenate(pos_parts, axis=0)  # sublane concat
    ch = ch_parts[0] if bp == 1 else jnp.concatenate(ch_parts, axis=0)

    # ---- fusion conv (BN folded) as two big K=C pushes; residual/bias already in `res` ----
    fused = (jnp.dot(pos.astype(jnp.bfloat16), w_p_ref[...],
                     preferred_element_type=jnp.float32)
             + jnp.dot(ch.astype(jnp.bfloat16), w_c_ref[...],
                       preferred_element_type=jnp.float32)
             + res)
    o_ref[...] = jnp.maximum(fused, 0.0)


def _pick_grid_steps(batch):
    """v7x has 2 TensorCores per chip -> split the batch across them; v5e/v6e have a
    single TC where the grid is a serial loop (~0.35us/step), so pack everything
    into one step."""
    try:
        kind = jax.devices()[0].device_kind.lower()
    except Exception:
        kind = ""
    cores = 2 if ("v7" in kind or "7x" in kind) else 1
    g = max(1, min(batch, cores))
    while batch % g:
        g -= 1
    return g


def dual_attention_pallas(x_blc, params, grid_steps=None):
    """x_blc: (B, N, C) float32 (channels-last token layout)."""
    B, N, C = x_blc.shape
    C8 = params["wq"].shape[0]
    f32 = jnp.float32

    gamma = jnp.asarray(params["gamma"], f32)
    beta = jnp.asarray(params["beta"], f32)

    # Eval-mode BN affine fold.
    bn_scale = params["bn_w"] / jnp.sqrt(params["bn_rv"] + 1e-5)             # (C,)
    bn_shift = params["bn_b"] - params["bn_rm"] * bn_scale

    # Fusion conv halves (token layout, columns scaled by BN).
    w_p = params["wf"][:, :C].T * bn_scale[None, :]                          # (C, C) position half
    w_c = params["wf"][:, C:].T * bn_scale[None, :]                          # (C, C) channel half
    w_r = w_p + w_c                                                          # residual "+x" of both branches
    b_r = (params["bf"] * bn_scale + bn_shift).reshape(1, C)                 # all constant bias terms
    w_c_beta = beta * w_c                                                    # exact scalar fold of beta

    # Q/K projection (fused, slices land at lane offsets 0/8) and value projection
    # with gamma folded into both weight and bias (exact; no row-sum assumption).
    w_qk = jnp.concatenate([params["wq"].T, params["wk"].T], axis=1)         # (C, 2*C8)
    b_qk = jnp.concatenate([params["bq"], params["bk"]]).reshape(1, 2 * C8)
    w_v = gamma * params["wv"].T                                             # (C, C)
    b_v = (gamma * params["bv"]).reshape(1, C)

    # bf16 weights for the MXU (f32 accumulation in-kernel).
    bf16 = jnp.bfloat16
    w_qk, w_v, w_r, w_p, w_c_beta = (a.astype(bf16) for a in (w_qk, w_v, w_r, w_p, w_c_beta))

    # Grid: split the batch across TensorCores (v7x) or pack it all (v5e/v6e).
    G = grid_steps if grid_steps is not None else _pick_grid_steps(B)
    assert B % G == 0, (B, G)
    Bp = B // G
    M = Bp * N

    # Right-sized scoped-VMEM budget (blanket 32 MiB would starve neighbouring
    # XLA fusions, especially on v7x's 64 MiB physical VMEM).
    io_bytes = 2 * 2 * M * C * 4                           # x + out, double buffered
    w_bytes = (2 * C8 + 4 * C) * C * 2 + (2 * C8 + 3 * C) * 4
    tmp_bytes = Bp * (6 * N * N + 2 * C * C) * 4 + 10 * M * C * 4
    vmem_limit = int(max(2 << 20, min(64 << 20, 2 * (io_bytes + w_bytes + tmp_bytes))))

    x2d = x_blc.reshape(B * N, C)                          # free layout change in XLA

    full2d = lambda r, c: pl.BlockSpec((r, c), lambda g: (0, 0))
    io_spec = pl.BlockSpec((M, C), lambda g: (g, 0))

    y2d = pl.pallas_call(
        functools.partial(dual_attention_kernel, n=N),
        out_shape=jax.ShapeDtypeStruct((B * N, C), jnp.float32),
        grid_spec=pltpu.PrefetchScalarGridSpec(
            num_scalar_prefetch=0,
            grid=(G,),
            in_specs=[
                io_spec,                                   # x
                full2d(C, 2 * C8), full2d(1, 2 * C8),      # W_qk, b_qk
                full2d(C, C), full2d(1, C),                # W_v,  b_v
                full2d(C, C), full2d(1, C),                # W_r,  b_r
                full2d(C, C),                              # W_p
                full2d(C, C),                              # W_c (beta-scaled)
            ],
            out_specs=io_spec,
        ),
        compiler_params=pltpu.CompilerParams(
            dimension_semantics=("parallel",),
            vmem_limit_bytes=vmem_limit,
        ),
    )(x2d, w_qk, b_qk, w_v, b_v, w_r, b_r, w_p, w_c_beta)

    return y2d.reshape(B, N, C)


def dual_attention_reference(x_nchw, p):
    """Pure-JAX mirror of the PyTorch forward (NCHW), for verification."""
    B, C, H, W = x_nchw.shape
    N = H * W
    xr = x_nchw.reshape(B, C, N)

    q = jnp.einsum("oc,bcn->bon", p["wq"], xr) + p["bq"][None, :, None]
    k = jnp.einsum("oc,bcn->bon", p["wk"], xr) + p["bk"][None, :, None]
    v = jnp.einsum("oc,bcn->bon", p["wv"], xr) + p["bv"][None, :, None]
    att = jax.nn.softmax(jnp.einsum("bcn,bcm->bnm", q, k), axis=-1)      # (B,N,N)
    out = jnp.einsum("bcn,bmn->bcm", v, att)
    pos = p["gamma"] * out + xr

    energy = jnp.einsum("bcn,bdn->bcd", xr, xr)
    attc = jax.nn.softmax(energy, axis=-1)
    outc = jnp.einsum("bcd,bdn->bcn", attc, xr)
    ch = p["beta"] * outc + xr

    cat = jnp.concatenate([pos, ch], axis=1)                             # (B,2C,N)
    fused = jnp.einsum("oc,bcn->bon", p["wf"], cat) + p["bf"][None, :, None]
    y = ((fused - p["bn_rm"][None, :, None])
         / jnp.sqrt(p["bn_rv"][None, :, None] + 1e-5)
         * p["bn_w"][None, :, None] + p["bn_b"][None, :, None])
    return jnp.maximum(y, 0.0).reshape(B, C, H, W)


def make_params(key, C):
    C8 = C // 8
    ks = jax.random.split(key, 10)
    f = jnp.float32
    return {
        "wq": 0.05 * jax.random.normal(ks[0], (C8, C), f),
        "bq": 0.05 * jax.random.normal(ks[1], (C8,), f),
        "wk": 0.05 * jax.random.normal(ks[2], (C8, C), f),
        "bk": 0.05 * jax.random.normal(ks[3], (C8,), f),
        "wv": 0.05 * jax.random.normal(ks[4], (C, C), f),
        "bv": 0.05 * jax.random.normal(ks[5], (C,), f),
        # torch inits gamma/beta to 0; nonzero deterministic values here so the
        # attention branches actually contribute to the output.
        "gamma": jnp.float32(0.5),
        "beta": jnp.float32(0.1),
        "wf": 0.05 * jax.random.normal(ks[6], (C, 2 * C), f),
        "bf": 0.05 * jax.random.normal(ks[7], (C,), f),
        "bn_w": 1.0 + 0.1 * jax.random.normal(ks[8], (C,), f),
        "bn_b": 0.1 * jax.random.normal(ks[9], (C,), f),
        "bn_rm": jnp.zeros((C,), f),
        "bn_rv": jnp.ones((C,), f),
    }


if __name__ == "__main__":
    B, C, H, W = 2, 64, 8, 8       # in_channels=64 -> query/key channels = 8
    N = H * W

    key = jax.random.PRNGKey(0)
    kx, kp = jax.random.split(key)
    x_nchw = 0.25 * jax.random.normal(kx, (B, C, H, W), jnp.float32)
    params = make_params(kp, C)

    # NCHW -> (B, N, C) channels-last token layout for the kernel.
    x_blc = jnp.transpose(x_nchw.reshape(B, C, N), (0, 2, 1))

    y_blc = jax.jit(functools.partial(dual_attention_pallas, params=params))(x_blc)
    y_blc = jax.block_until_ready(y_blc)

    # back to NCHW and compare against the pure-JAX (f32) reference
    y_nchw = jnp.transpose(y_blc, (0, 2, 1)).reshape(B, C, H, W)
    y_ref = dual_attention_reference(x_nchw, params)

    assert y_nchw.shape == (B, C, H, W)
    max_err = float(jnp.max(jnp.abs(y_nchw - y_ref)))
    assert jnp.allclose(y_nchw, y_ref, atol=5e-2, rtol=5e-2), max_err
    print("KERNEL_OK")
</pallas_src>

<mosaic_0001>
module attributes {stable_mosaic.version = 11 : i64} {
  func.func @dual_attention_kernel(%arg0: i32, %arg1: memref<128x64xf32, #tpu.memory_space<vmem>>, %arg2: memref<64x16xbf16, #tpu.memory_space<vmem>>, %arg3: memref<1x16xf32, #tpu.memory_space<vmem>>, %arg4: memref<64x64xbf16, #tpu.memory_space<vmem>>, %arg5: memref<1x64xf32, #tpu.memory_space<vmem>>, %arg6: memref<64x64xbf16, #tpu.memory_space<vmem>>, %arg7: memref<1x64xf32, #tpu.memory_space<vmem>>, %arg8: memref<64x64xbf16, #tpu.memory_space<vmem>>, %arg9: memref<64x64xbf16, #tpu.memory_space<vmem>>, %arg10: memref<128x64xf32, #tpu.memory_space<vmem>>) attributes {dimension_semantics = [#tpu.dimension_semantics<parallel>], iteration_bounds = array<i64: 1>, scalar_prefetch = 0 : i64, scratch_operands = 0 : i64, tpu.core_type = #tpu.core_type<tc>, window_params = [{transform_indices = @transform_0, window_bounds = array<i64: 128, 64>}, {pipeline_mode = #tpu.pipeline_mode<synchronous>, transform_indices = @transform_1, window_bounds = array<i64: 64, 16>}, {pipeline_mode = #tpu.pipeline_mode<synchronous>, transform_indices = @transform_2, window_bounds = array<i64: 1, 16>}, {pipeline_mode = #tpu.pipeline_mode<synchronous>, transform_indices = @transform_3, window_bounds = array<i64: 64, 64>}, {pipeline_mode = #tpu.pipeline_mode<synchronous>, transform_indices = @transform_4, window_bounds = array<i64: 1, 64>}, {pipeline_mode = #tpu.pipeline_mode<synchronous>, transform_indices = @transform_5, window_bounds = array<i64: 64, 64>}, {pipeline_mode = #tpu.pipeline_mode<synchronous>, transform_indices = @transform_6, window_bounds = array<i64: 1, 64>}, {pipeline_mode = #tpu.pipeline_mode<synchronous>, transform_indices = @transform_7, window_bounds = array<i64: 64, 64>}, {pipeline_mode = #tpu.pipeline_mode<synchronous>, transform_indices = @transform_8, window_bounds = array<i64: 64, 64>}, {transform_indices = @transform_9, window_bounds = array<i64: 128, 64>}]} {
    %c0 = arith.constant 0 : index
    %c0_0 = arith.constant 0 : index
    %0 = vector.load %arg1[%c0, %c0_0] : memref<128x64xf32, #tpu.memory_space<vmem>>, vector<128x64xf32>
    %1 = arith.truncf %0 : vector<128x64xf32> to vector<128x64xbf16>
    %c0_1 = arith.constant 0 : index
    %c0_2 = arith.constant 0 : index
    %2 = vector.load %arg2[%c0_1, %c0_2] : memref<64x16xbf16, #tpu.memory_space<vmem>>, vector<64x16xbf16>
    %cst = arith.constant dense<0.000000e+00> : vector<128x16xf32>
    %3 = tpu.matmul %1, %2, %cst {dimension_numbers = #tpu.dot_dimension_numbers<[1], [0], [0], [1], [0, 0, 1, 1], [], []>} : vector<128x64xbf16>, vector<64x16xbf16>, vector<128x16xf32> -> vector<128x16xf32>
    %c0_3 = arith.constant 0 : index
    %c0_4 = arith.constant 0 : index
    %4 = vector.load %arg3[%c0_3, %c0_4] : memref<1x16xf32, #tpu.memory_space<vmem>>, vector<1x16xf32>
    %5 = vector.broadcast %4 : vector<1x16xf32> to vector<128x16xf32>
    %6 = arith.addf %3, %5 : vector<128x16xf32>
    %c0_5 = arith.constant 0 : index
    %c0_6 = arith.constant 0 : index
    %7 = vector.load %arg4[%c0_5, %c0_6] : memref<64x64xbf16, #tpu.memory_space<vmem>>, vector<64x64xbf16>
    %cst_7 = arith.constant dense<0.000000e+00> : vector<128x64xf32>
    %8 = tpu.matmul %1, %7, %cst_7 {dimension_numbers = #tpu.dot_dimension_numbers<[1], [0], [0], [1], [0, 0, 1, 1], [], []>} : vector<128x64xbf16>, vector<64x64xbf16>, vector<128x64xf32> -> vector<128x64xf32>
    %c0_8 = arith.constant 0 : index
    %c0_9 = arith.constant 0 : index
    %9 = vector.load %arg5[%c0_8, %c0_9] : memref<1x64xf32, #tpu.memory_space<vmem>>, vector<1x64xf32>
    %10 = vector.broadcast %9 : vector<1x64xf32> to vector<128x64xf32>
    %11 = arith.addf %8, %10 : vector<128x64xf32>
    %c0_10 = arith.constant 0 : index
    %c0_11 = arith.constant 0 : index
    %12 = vector.load %arg6[%c0_10, %c0_11] : memref<64x64xbf16, #tpu.memory_space<vmem>>, vector<64x64xbf16>
    %cst_12 = arith.constant dense<0.000000e+00> : vector<128x64xf32>
    %13 = tpu.matmul %1, %12, %cst_12 {dimension_numbers = #tpu.dot_dimension_numbers<[1], [0], [0], [1], [0, 0, 1, 1], [], []>} : vector<128x64xbf16>, vector<64x64xbf16>, vector<128x64xf32> -> vector<128x64xf32>
    %c0_13 = arith.constant 0 : index
    %c0_14 = arith.constant 0 : index
    %14 = vector.load %arg7[%c0_13, %c0_14] : memref<1x64xf32, #tpu.memory_space<vmem>>, vector<1x64xf32>
    %15 = vector.broadcast %14 : vector<1x64xf32> to vector<128x64xf32>
    %16 = arith.addf %13, %15 : vector<128x64xf32>
    %17 = vector.extract_strided_slice %6 {offsets = [0, 0], sizes = [128, 8], strides = [1, 1]} : vector<128x16xf32> to vector<128x8xf32>
    %18 = arith.truncf %17 : vector<128x8xf32> to vector<128x8xbf16>
    %19 = vector.extract_strided_slice %6 {offsets = [0, 8], sizes = [128, 8], strides = [1, 1]} : vector<128x16xf32> to vector<128x8xf32>
    %20 = arith.truncf %19 : vector<128x8xf32> to vector<128x8xbf16>
    %21 = arith.truncf %11 : vector<128x64xf32> to vector<128x64xbf16>
    %22 = vector.extract_strided_slice %18 {offsets = [0, 0], sizes = [64, 8], strides = [1, 1]} : vector<128x8xbf16> to vector<64x8xbf16>
    %23 = vector.extract_strided_slice %20 {offsets = [0, 0], sizes = [64, 8], strides = [1, 1]} : vector<128x8xbf16> to vector<64x8xbf16>
    %24 = vector.extract_strided_slice %21 {offsets = [0, 0], sizes = [64, 64], strides = [1, 1]} : vector<128x64xbf16> to vector<64x64xbf16>
    %25 = vector.extract_strided_slice %1 {offsets = [0, 0], sizes = [64, 64], strides = [1, 1]} : vector<128x64xbf16> to vector<64x64xbf16>
    %cst_15 = arith.constant dense<0.000000e+00> : vector<64x64xf32>
    %26 = tpu.matmul %22, %23, %cst_15 {dimension_numbers = #tpu.dot_dimension_numbers<[1], [1], [0], [0], [0, 0, 1, 0], [], []>} : vector<64x8xbf16>, vector<64x8xbf16>, vector<64x64xf32> -> vector<64x64xf32>
    %cst_16 = arith.constant dense<0xFF800000> : vector<64xf32>
    %27 = vector.multi_reduction <maximumf>, %26, %cst_16 [1] : vector<64x64xf32> to vector<64xf32>
    %28 = vector.shape_cast %27 : vector<64xf32> to vector<64x1xf32>
    %29 = vector.broadcast %28 : vector<64x1xf32> to vector<64x64xf32>
    %30 = arith.subf %26, %29 : vector<64x64xf32>
    %31 = math.exp %30 : vector<64x64xf32>
    %cst_17 = arith.constant dense<0.000000e+00> : vector<64xf32>
    %32 = vector.multi_reduction <add>, %31, %cst_17 [1] : vector<64x64xf32> to vector<64xf32>
    %33 = vector.shape_cast %32 : vector<64xf32> to vector<64x1xf32>
    %34 = tpu.reciprocal %33 {approx = true} : vector<64x1xf32> -> vector<64x1xf32>
    %35 = vector.broadcast %34 : vector<64x1xf32> to vector<64x64xf32>
    %36 = arith.mulf %31, %35 : vector<64x64xf32>
    %37 = arith.truncf %36 : vector<64x64xf32> to vector<64x64xbf16>
    %cst_18 = arith.constant dense<0.000000e+00> : vector<64x64xf32>
    %38 = tpu.matmul %37, %24, %cst_18 {dimension_numbers = #tpu.dot_dimension_numbers<[1], [0], [0], [1], [0, 0, 1, 1], [], []>} : vector<64x64xbf16>, vector<64x64xbf16>, vector<64x64xf32> -> vector<64x64xf32>
    %cst_19 = arith.constant dense<0.000000e+00> : vector<64x64xf32>
    %39 = tpu.matmul %25, %25, %cst_19 {dimension_numbers = #tpu.dot_dimension_numbers<[0], [0], [1], [1], [0, 1, 1, 1], [], []>} : vector<64x64xbf16>, vector<64x64xbf16>, vector<64x64xf32> -> vector<64x64xf32>
    %cst_20 = arith.constant dense<0xFF800000> : vector<64xf32>
    %40 = vector.multi_reduction <maximumf>, %39, %cst_20 [0] : vector<64x64xf32> to vector<64xf32>
    %41 = vector.shape_cast %40 : vector<64xf32> to vector<1x64xf32>
    %42 = vector.broadcast %41 : vector<1x64xf32> to vector<64x64xf32>
    %43 = arith.subf %39, %42 : vector<64x64xf32>
    %44 = math.exp %43 : vector<64x64xf32>
    %cst_21 = arith.constant dense<0.000000e+00> : vector<64xf32>
    %45 = vector.multi_reduction <add>, %44, %cst_21 [0] : vector<64x64xf32> to vector<64xf32>
    %46 = vector.shape_cast %45 : vector<64xf32> to vector<1x64xf32>
    %47 = tpu.reciprocal %46 {approx = true} : vector<1x64xf32> -> vector<1x64xf32>
    %48 = vector.broadcast %47 : vector<1x64xf32> to vector<64x64xf32>
    %49 = arith.mulf %44, %48 : vector<64x64xf32>
    %50 = arith.truncf %49 : vector<64x64xf32> to vector<64x64xbf16>
    %cst_22 = arith.constant dense<0.000000e+00> : vector<64x64xf32>
    %51 = tpu.matmul %25, %50, %cst_22 {dimension_numbers = #tpu.dot_dimension_numbers<[1], [0], [0], [1], [0, 0, 1, 1], [], []>} : vector<64x64xbf16>, vector<64x64xbf16>, vector<64x64xf32> -> vector<64x64xf32>
    %52 = vector.extract_strided_slice %18 {offsets = [64, 0], sizes = [64, 8], strides = [1, 1]} : vector<128x8xbf16> to vector<64x8xbf16>
    %53 = vector.extract_strided_slice %20 {offsets = [64, 0], sizes = [64, 8], strides = [1, 1]} : vector<128x8xbf16> to vector<64x8xbf16>
    %54 = vector.extract_strided_slice %21 {offsets = [64, 0], sizes = [64, 64], strides = [1, 1]} : vector<128x64xbf16> to vector<64x64xbf16>
    %55 = vector.extract_strided_slice %1 {offsets = [64, 0], sizes = [64, 64], strides = [1, 1]} : vector<128x64xbf16> to vector<64x64xbf16>
    %cst_23 = arith.constant dense<0.000000e+00> : vector<64x64xf32>
    %56 = tpu.matmul %52, %53, %cst_23 {dimension_numbers = #tpu.dot_dimension_numbers<[1], [1], [0], [0], [0, 0, 1, 0], [], []>} : vector<64x8xbf16>, vector<64x8xbf16>, vector<64x64xf32> -> vector<64x64xf32>
    %cst_24 = arith.constant dense<0xFF800000> : vector<64xf32>
    %57 = vector.multi_reduction <maximumf>, %56, %cst_24 [1] : vector<64x64xf32> to vector<64xf32>
    %58 = vector.shape_cast %57 : vector<64xf32> to vector<64x1xf32>
    %59 = vector.broadcast %58 : vector<64x1xf32> to vector<64x64xf32>
    %60 = arith.subf %56, %59 : vector<64x64xf32>
    %61 = math.exp %60 : vector<64x64xf32>
    %cst_25 = arith.constant dense<0.000000e+00> : vector<64xf32>
    %62 = vector.multi_reduction <add>, %61, %cst_25 [1] : vector<64x64xf32> to vector<64xf32>
    %63 = vector.shape_cast %62 : vector<64xf32> to vector<64x1xf32>
    %64 = tpu.reciprocal %63 {approx = true} : vector<64x1xf32> -> vector<64x1xf32>
    %65 = vector.broadcast %64 : vector<64x1xf32> to vector<64x64xf32>
    %66 = arith.mulf %61, %65 : vector<64x64xf32>
    %67 = arith.truncf %66 : vector<64x64xf32> to vector<64x64xbf16>
    %cst_26 = arith.constant dense<0.000000e+00> : vector<64x64xf32>
    %68 = tpu.matmul %67, %54, %cst_26 {dimension_numbers = #tpu.dot_dimension_numbers<[1], [0], [0], [1], [0, 0, 1, 1], [], []>} : vector<64x64xbf16>, vector<64x64xbf16>, vector<64x64xf32> -> vector<64x64xf32>
    %cst_27 = arith.constant dense<0.000000e+00> : vector<64x64xf32>
    %69 = tpu.matmul %55, %55, %cst_27 {dimension_numbers = #tpu.dot_dimension_numbers<[0], [0], [1], [1], [0, 1, 1, 1], [], []>} : vector<64x64xbf16>, vector<64x64xbf16>, vector<64x64xf32> -> vector<64x64xf32>
    %cst_28 = arith.constant dense<0xFF800000> : vector<64xf32>
    %70 = vector.multi_reduction <maximumf>, %69, %cst_28 [0] : vector<64x64xf32> to vector<64xf32>
    %71 = vector.shape_cast %70 : vector<64xf32> to vector<1x64xf32>
    %72 = vector.broadcast %71 : vector<1x64xf32> to vector<64x64xf32>
    %73 = arith.subf %69, %72 : vector<64x64xf32>
    %74 = math.exp %73 : vector<64x64xf32>
    %cst_29 = arith.constant dense<0.000000e+00> : vector<64xf32>
    %75 = vector.multi_reduction <add>, %74, %cst_29 [0] : vector<64x64xf32> to vector<64xf32>
    %76 = vector.shape_cast %75 : vector<64xf32> to vector<1x64xf32>
    %77 = tpu.reciprocal %76 {approx = true} : vector<1x64xf32> -> vector<1x64xf32>
    %78 = vector.broadcast %77 : vector<1x64xf32> to vector<64x64xf32>
    %79 = arith.mulf %74, %78 : vector<64x64xf32>
    %80 = arith.truncf %79 : vector<64x64xf32> to vector<64x64xbf16>
    %cst_30 = arith.constant dense<0.000000e+00> : vector<64x64xf32>
    %81 = tpu.matmul %55, %80, %cst_30 {dimension_numbers = #tpu.dot_dimension_numbers<[1], [0], [0], [1], [0, 0, 1, 1], [], []>} : vector<64x64xbf16>, vector<64x64xbf16>, vector<64x64xf32> -> vector<64x64xf32>
    %82 = tpu.concatenate %38, %68 in 0 : vector<64x64xf32>, vector<64x64xf32> -> vector<128x64xf32>
    %83 = tpu.concatenate %51, %81 in 0 : vector<64x64xf32>, vector<64x64xf32> -> vector<128x64xf32>
    %84 = arith.truncf %82 : vector<128x64xf32> to vector<128x64xbf16>
    %c0_31 = arith.constant 0 : index
    %c0_32 = arith.constant 0 : index
    %85 = vector.load %arg8[%c0_31, %c0_32] : memref<64x64xbf16, #tpu.memory_space<vmem>>, vector<64x64xbf16>
    %cst_33 = arith.constant dense<0.000000e+00> : vector<128x64xf32>
    %86 = tpu.matmul %84, %85, %cst_33 {dimension_numbers = #tpu.dot_dimension_numbers<[1], [0], [0], [1], [0, 0, 1, 1], [], []>} : vector<128x64xbf16>, vector<64x64xbf16>, vector<128x64xf32> -> vector<128x64xf32>
    %87 = arith.truncf %83 : vector<128x64xf32> to vector<128x64xbf16>
    %c0_34 = arith.constant 0 : index
    %c0_35 = arith.constant 0 : index
    %88 = vector.load %arg9[%c0_34, %c0_35] : memref<64x64xbf16, #tpu.memory_space<vmem>>, vector<64x64xbf16>
    %cst_36 = arith.constant dense<0.000000e+00> : vector<128x64xf32>
    %89 = tpu.matmul %87, %88, %cst_36 {dimension_numbers = #tpu.dot_dimension_numbers<[1], [0], [0], [1], [0, 0, 1, 1], [], []>} : vector<128x64xbf16>, vector<64x64xbf16>, vector<128x64xf32> -> vector<128x64xf32>
    %90 = arith.addf %86, %89 : vector<128x64xf32>
    %91 = arith.addf %90, %16 : vector<128x64xf32>
    %cst_37 = arith.constant 0.000000e+00 : f32
    %92 = vector.broadcast %cst_37 : f32 to vector<128x64xf32>
    %93 = arith.maximumf %91, %92 : vector<128x64xf32>
    %c0_38 = arith.constant 0 : index
    %c0_39 = arith.constant 0 : index
    %94 = vector.load %arg10[%c0_38, %c0_39] : memref<128x64xf32, #tpu.memory_space<vmem>>, vector<128x64xf32>
    tpu.vector_store %arg10[%c0_38, %c0_39], %93 {strides = array<i32>} : memref<128x64xf32, #tpu.memory_space<vmem>>, vector<128x64xf32>,
    return
  }
  func.func @transform_0(%arg0: i32) -> (i32, i32) {
    %c0_i32 = arith.constant 0 : i32
    %c0_i32_0 = arith.constant 0 : i32
    return %arg0, %c0_i32 : i32, i32
  }
  func.func @transform_1(%arg0: i32) -> (i32, i32) {
    %c0_i32 = arith.constant 0 : i32
    %c0_i32_0 = arith.constant 0 : i32
    %c0_i32_1 = arith.constant 0 : i32
    return %c0_i32, %c0_i32_0 : i32, i32
  }
  func.func @transform_2(%arg0: i32) -> (i32, i32) {
    %c0_i32 = arith.constant 0 : i32
    %c0_i32_0 = arith.constant 0 : i32
    %c0_i32_1 = arith.constant 0 : i32
    return %c0_i32, %c0_i32_0 : i32, i32
  }
  func.func @transform_3(%arg0: i32) -> (i32, i32) {
    %c0_i32 = arith.constant 0 : i32
    %c0_i32_0 = arith.constant 0 : i32
    %c0_i32_1 = arith.constant 0 : i32
    return %c0_i32, %c0_i32_0 : i32, i32
  }
  func.func @transform_4(%arg0: i32) -> (i32, i32) {
    %c0_i32 = arith.constant 0 : i32
    %c0_i32_0 = arith.constant 0 : i32
    %c0_i32_1 = arith.constant 0 : i32
    return %c0_i32, %c0_i32_0 : i32, i32
  }
  func.func @transform_5(%arg0: i32) -> (i32, i32) {
    %c0_i32 = arith.constant 0 : i32
    %c0_i32_0 = arith.constant 0 : i32
    %c0_i32_1 = arith.constant 0 : i32
    return %c0_i32, %c0_i32_0 : i32, i32
  }
  func.func @transform_6(%arg0: i32) -> (i32, i32) {
    %c0_i32 = arith.constant 0 : i32
    %c0_i32_0 = arith.constant 0 : i32
    %c0_i32_1 = arith.constant 0 : i32
    return %c0_i32, %c0_i32_0 : i32, i32
  }
  func.func @transform_7(%arg0: i32) -> (i32, i32) {
    %c0_i32 = arith.constant 0 : i32
    %c0_i32_0 = arith.constant 0 : i32
    %c0_i32_1 = arith.constant 0 : i32
    return %c0_i32, %c0_i32_0 : i32, i32
  }
  func.func @transform_8(%arg0: i32) -> (i32, i32) {
    %c0_i32 = arith.constant 0 : i32
    %c0_i32_0 = arith.constant 0 : i32
    %c0_i32_1 = arith.constant 0 : i32
    return %c0_i32, %c0_i32_0 : i32, i32
  }
  func.func @transform_9(%arg0: i32) -> (i32, i32) {
    %c0_i32 = arith.constant 0 : i32
    %c0_i32_0 = arith.constant 0 : i32
    return %arg0, %c0_i32 : i32, i32
  }
}

</mosaic_0001>

<llo_original>
// kernel: dual_attention_pallas.1
$region0: #{dual_attention_pallas.1}
  #allocation0 [shape = 'u32[]', space=smem, size = 0x4, offset = 0x4, fixed_abs, tag = 'smem constant byte address 0x4 - core index']
  #allocation1 [shape = 'u32[144,128]{1,0:T(1,128)}', space=vmem, size = 0x12000, scoped, tag = 'internal scratch']
  %s0 = inlined_call_operand.hbm [shape: f32[128,64], index: 0, kind: input, shape index: {}]
  %s1 = inlined_call_operand.hbm [shape: bf16[64,16], index: 1, kind: input, shape index: {}]
  %s2 = inlined_call_operand.vmem [shape: f32[1,16], index: 2, kind: input, shape index: {}]
  %s3 = inlined_call_operand.hbm [shape: bf16[64,64], index: 3, kind: input, shape index: {}]
  %s4 = inlined_call_operand.vmem [shape: f32[1,64], index: 4, kind: input, shape index: {}]
  %s5 = inlined_call_operand.hbm [shape: bf16[64,64], index: 5, kind: input, shape index: {}]
  %s6 = inlined_call_operand.vmem [shape: f32[1,64], index: 6, kind: input, shape index: {}]
  %s7 = inlined_call_operand.hbm [shape: bf16[64,64], index: 7, kind: input, shape index: {}]
  %s8 = inlined_call_operand.hbm [shape: bf16[64,64], index: 8, kind: input, shape index: {}]
  %s9 = inlined_call_operand.hbm [shape: f32[128,64], index: 9, kind: output, shape index: {}]
  %s10 = sld [smem:[#allocation0]]
  $region70: #{dual_attention_pallas.1} parent=0
    _
  %s12 = ssub.s32 1, %s10
  %s13 = scalar_select 0, %s12, %s10
  $region1: #{dual_attention_pallas.1} parent=0
    #allocation2 [shape = 'u8[65536]{0}', space=vmem, size = 0x10000, scoped, tag = 'input window, operand 0, single buffered']
    #allocation3 [shape = 's32[1]{0}', space=sflag, size = 0x4, scoped, tag = 'scoped memory for dual_attention_pallas.1']
    #allocation4 [shape = 's32[1]{0}', space=sflag, size = 0x4, scoped, tag = 'scoped memory for dual_attention_pallas.1']
    #allocation5 [shape = 'u8[16384]{0}', space=vmem, size = 0x4000, scoped, tag = 'input window, operand 1, single buffered']
    #allocation6 [shape = 's32[1]{0}', space=sflag, size = 0x4, scoped, tag = 'scoped memory for dual_attention_pallas.1']
    #allocation7 [shape = 'u8[16384]{0}', space=vmem, size = 0x4000, scoped, tag = 'input window, operand 3, single buffered']
    #allocation8 [shape = 'u8[16384]{0}', space=vmem, size = 0x4000, scoped, tag = 'input window, operand 5, single buffered']
    #allocation9 [shape = 's32[1]{0}', space=sflag, size = 0x4, scoped, tag = 'scoped memory for dual_attention_pallas.1']
    #allocation10 [shape = 'u8[16384]{0}', space=vmem, size = 0x4000, scoped, tag = 'input window, operand 7, single buffered']
    #allocation11 [shape = 'u8[16384]{0}', space=vmem, size = 0x4000, scoped, tag = 'input window, operand 8, single buffered']
    #allocation12 [shape = 's32[1]{0}', space=sflag, size = 0x4, scoped, tag = 'scoped memory for dual_attention_pallas.1']
    #allocation13 [shape = 'u8[65536]{0}', space=vmem, size = 0x10000, scoped, tag = 'output window, operand 0, single buffered']
    %14 = vsyncpa [#allocation3], 0
    %15 = vsyncpa [#allocation6], 0
    %16 = vsyncpa [#allocation9], 0
    %17 = vsyncpa [#allocation12], 0
    %18 = vsyncpa [#allocation4], 0
    // Predicated region
    $region2: #{dual_attention_pallas.1} parent=1 // pred_check
      _
    $region3: #{dual_attention_pallas.1} parent=1 // pred_check_branch
      %20 = sbr.rel (0) target = $region5
    $region4: #{dual_attention_pallas.1} parent=1 // pred_region
      %s22 = ssub.s32 2048, 2048
      %23 = vsyncadd [#allocation3], %s22
      %s24 = sshll.u32 [#allocation2], 4
      %s25 = int_to_ptr.vmem [resolvable:$true] %s24
      %30 = dma.hbm_to_vmem [thread:$0]  %s0, 2048, %s25, [#allocation3], 128, 128, 8
    $region5: #{dual_attention_pallas.1} parent=1 // pred_fallthru
      _
    // Predicated region
    $region6: #{dual_attention_pallas.1} parent=1 // pred_check
      _
    $region7: #{dual_attention_pallas.1} parent=1 // pred_check_branch
      %32 = sbr.rel (0) target = $region9
    $region8: #{dual_attention_pallas.1} parent=1 // pred_region
      %s34 = ssub.s32 512, 512
      %35 = vsyncadd [#allocation6], %s34
      %s36 = sshll.u32 [#allocation5], 4
      %s37 = int_to_ptr.vmem [resolvable:$true] %s36
      %42 = dma.hbm_to_vmem [thread:$0]  %s1, 512, %s37, [#allocation6], 64, 64, 4
    $region9: #{dual_attention_pallas.1} parent=1 // pred_fallthru
      _
    // Predicated region
    $region10: #{dual_attention_pallas.1} parent=1 // pred_check
      _
    $region11: #{dual_attention_pallas.1} parent=1 // pred_check_branch
      %44 = sbr.rel (0) target = $region13
    $region12: #{dual_attention_pallas.1} parent=1 // pred_region
      _
    $region13: #{dual_attention_pallas.1} parent=1 // pred_fallthru
      _
    // Predicated region
    $region14: #{dual_attention_pallas.1} parent=1 // pred_check
      _
    $region15: #{dual_attention_pallas.1} parent=1 // pred_check_branch
      %46 = sbr.rel (0) target = $region17
    $region16: #{dual_attention_pallas.1} parent=1 // pred_region
      %s48 = ssub.s32 512, 512
      %49 = vsyncadd [#allocation6], %s48
      %s50 = sshll.u32 [#allocation7], 4
      %s51 = int_to_ptr.vmem [resolvable:$true] %s50
      %56 = dma.hbm_to_vmem [thread:$0]  %s3, 512, %s51, [#allocation6], 64, 64, 4
    $region17: #{dual_attention_pallas.1} parent=1 // pred_fallthru
      _
    // Predicated region
    $region18: #{dual_attention_pallas.1} parent=1 // pred_check
      _
    $region19: #{dual_attention_pallas.1} parent=1 // pred_check_branch
      %58 = sbr.rel (0) target = $region21
    $region20: #{dual_attention_pallas.1} parent=1 // pred_region
      _
    $region21: #{dual_attention_pallas.1} parent=1 // pred_fallthru
      _
    // Predicated region
    $region22: #{dual_attention_pallas.1} parent=1 // pred_check
      _
    $region23: #{dual_attention_pallas.1} parent=1 // pred_check_branch
      %60 = sbr.rel (0) target = $region25
    $region24: #{dual_attention_pallas.1} parent=1 // pred_region
      %s62 = ssub.s32 512, 512
      %63 = vsyncadd [#allocation9], %s62
      %s64 = sshll.u32 [#allocation8], 4
      %s65 = int_to_ptr.vmem [resolvable:$true] %s64
      %70 = dma.hbm_to_vmem [thread:$0]  %s5, 512, %s65, [#allocation9], 64, 64, 4
    $region25: #{dual_attention_pallas.1} parent=1 // pred_fallthru
      _
    // Predicated region
    $region26: #{dual_attention_pallas.1} parent=1 // pred_check
      _
    $region27: #{dual_attention_pallas.1} parent=1 // pred_check_branch
      %72 = sbr.rel (0) target = $region29
    $region28: #{dual_attention_pallas.1} parent=1 // pred_region
      _
    $region29: #{dual_attention_pallas.1} parent=1 // pred_fallthru
      _
    // Predicated region
    $region30: #{dual_attention_pallas.1} parent=1 // pred_check
      _
    $region31: #{dual_attention_pallas.1} parent=1 // pred_check_branch
      %74 = sbr.rel (0) target = $region33
    $region32: #{dual_attention_pallas.1} parent=1 // pred_region
      %s76 = ssub.s32 512, 512
      %77 = vsyncadd [#allocation9], %s76
      %s78 = sshll.u32 [#allocation10], 4
      %s79 = int_to_ptr.vmem [resolvable:$true] %s78
      %84 = dma.hbm_to_vmem [thread:$0]  %s7, 512, %s79, [#allocation9], 64, 64, 4
    $region33: #{dual_attention_pallas.1} parent=1 // pred_fallthru
      _
    // Predicated region
    $region34: #{dual_attention_pallas.1} parent=1 // pred_check
      _
    $region35: #{dual_attention_pallas.1} parent=1 // pred_check_branch
      %86 = sbr.rel (0) target = $region37
    $region36: #{dual_attention_pallas.1} parent=1 // pred_region
      %s88 = ssub.s32 512, 512
      %89 = vsyncadd [#allocation12], %s88
      %s90 = sshll.u32 [#allocation11], 4
      %s91 = int_to_ptr.vmem [resolvable:$true] %s90
      %96 = dma.hbm_to_vmem [thread:$0]  %s8, 512, %s91, [#allocation12], 64, 64, 4
    $region37: #{dual_attention_pallas.1} parent=1 // pred_fallthru
      _
    // Predicated region
    $region38: #{dual_attention_pallas.1} parent=1 // pred_check
      _
    $region39: #{dual_attention_pallas.1} parent=1 // pred_check_branch
      %98 = sbr.rel (0) target = $region41
    $region40: #{dual_attention_pallas.1} parent=1 // pred_region
      %99 = dma.done [#allocation3], 2048
    $region41: #{dual_attention_pallas.1} parent=1 // pred_fallthru
      _
    // Predicated region
    $region42: #{dual_attention_pallas.1} parent=1 // pred_check
      _
    $region43: #{dual_attention_pallas.1} parent=1 // pred_check_branch
      %101 = sbr.rel (0) target = $region45
    $region44: #{dual_attention_pallas.1} parent=1 // pred_region
      %102 = dma.done [#allocation6], 512
    $region45: #{dual_attention_pallas.1} parent=1 // pred_fallthru
      _
    // Predicated region
    $region46: #{dual_attention_pallas.1} parent=1 // pred_check
      _
    $region47: #{dual_attention_pallas.1} parent=1 // pred_check_branch
      %104 = sbr.rel (0) target = $region49
    $region48: #{dual_attention_pallas.1} parent=1 // pred_region
      %105 = dma.done [#allocation6], 512
    $region49: #{dual_attention_pallas.1} parent=1 // pred_fallthru
      _
    // Predicated region
    $region50: #{dual_attention_pallas.1} parent=1 // pred_check
      _
    $region51: #{dual_attention_pallas.1} parent=1 // pred_check_branch
      %107 = sbr.rel (0) target = $region53
    $region52: #{dual_attention_pallas.1} parent=1 // pred_region
      %108 = dma.done [#allocation9], 512
    $region53: #{dual_attention_pallas.1} parent=1 // pred_fallthru
      _
    // Predicated region
    $region54: #{dual_attention_pallas.1} parent=1 // pred_check
      _
    $region55: #{dual_attention_pallas.1} parent=1 // pred_check_branch
      %110 = sbr.rel (0) target = $region57
    $region56: #{dual_attention_pallas.1} parent=1 // pred_region
      %111 = dma.done [#allocation9], 512
    $region57: #{dual_attention_pallas.1} parent=1 // pred_fallthru
      _
    // Predicated region
    $region58: #{dual_attention_pallas.1} parent=1 // pred_check
      _
    $region59: #{dual_attention_pallas.1} parent=1 // pred_check_branch
      %113 = sbr.rel (0) target = $region61
    $region60: #{dual_attention_pallas.1} parent=1 // pred_region
      %114 = dma.done [#allocation12], 512
    $region61: #{dual_attention_pallas.1} parent=1 // pred_fallthru
      _
    %v116 = vld [vmem:[#allocation2] sm:$0xff]
    %v117 = vld [vmem:[#allocation2 + $0x8] sm:$0xff]
    %v118 = vld [vmem:[#allocation2 + $0x10] sm:$0xff]
    %v119 = vld [vmem:[#allocation2 + $0x18] sm:$0xff]
    %v120 = vld [vmem:[#allocation2 + $0x20] sm:$0xff]
    %v121 = vld [vmem:[#allocation2 + $0x28] sm:$0xff]
    %v122 = vld [vmem:[#allocation2 + $0x30] sm:$0xff]
    %v123 = vld [vmem:[#allocation2 + $0x38] sm:$0xff]
    %v124 = vld [vmem:[#allocation2 + $0x40] sm:$0xff]
    %v125 = vld [vmem:[#allocation2 + $0x48] sm:$0xff]
    %v126 = vld [vmem:[#allocation2 + $0x50] sm:$0xff]
    %v127 = vld [vmem:[#allocation2 + $0x58] sm:$0xff]
    %v128 = vld [vmem:[#allocation2 + $0x60] sm:$0xff]
    %v129 = vld [vmem:[#allocation2 + $0x68] sm:$0xff]
    %v130 = vld [vmem:[#allocation2 + $0x70] sm:$0xff]
    %v131 = vld [vmem:[#allocation2 + $0x78] sm:$0xff]
    %v132 = vpack.c.bf16 %v117, %v116
    %v133 = vpack.c.bf16 %v119, %v118
    %v134 = vpack.c.bf16 %v121, %v120
    %v135 = vpack.c.bf16 %v123, %v122
    %v136 = vpack.c.bf16 %v125, %v124
    %v137 = vpack.c.bf16 %v127, %v126
    %v138 = vpack.c.bf16 %v129, %v128
    %v139 = vpack.c.bf16 %v131, %v130
    %v140 = vld [vmem:[#allocation5] sm:$0xf]
    %v141 = vld [vmem:[#allocation5 + $0x4] sm:$0xf]
    %v142 = vld [vmem:[#allocation5 + $0x8] sm:$0xf]
    %v143 = vld [vmem:[#allocation5 + $0xc] sm:$0xf]
    %v144 = vld [vmem:[#allocation5 + $0x10] sm:$0xf]
    %v145 = vld [vmem:[#allocation5 + $0x14] sm:$0xf]
    %v146 = vld [vmem:[#allocation5 + $0x18] sm:$0xf]
    %v147 = vld [vmem:[#allocation5 + $0x1c] sm:$0xf]
    %v148 = vld [vmem:[%s2] sm:$0x1]
    %v150 = vlaneseq
    %v151 = vshrl.u32 %v150, 7
    %v152 = vsub.s32 0, %v151
    %v153 = vrot.slane %v148, %v152
    %v163 = vunpack.c.l.b16 %v140
    %v164 = vunpack.c.l.b16 %v141
    %v165 = vunpack.c.l.b16 %v142
    %v166 = vunpack.c.l.b16 %v143
    %v167 = vunpack.c.l.b16 %v144
    %v168 = vunpack.c.l.b16 %v145
    %v169 = vunpack.c.l.b16 %v146
    %v170 = vunpack.c.l.b16 %v147
    %v171 = vpack.c.b16 %v164, %v163
    %v172 = vpack.c.b16 %v166, %v165
    %v173 = vpack.c.b16 %v168, %v167
    %v174 = vpack.c.b16 %v170, %v169
    %vm179 = vcmask 523264
    %v181 = vsel %vm179, %v132, 0
    %v184 = vsel %vm179, %v133, 0
    %v187 = vsel %vm179, %v134, 0
    %v190 = vsel %vm179, %v135, 0
    %v193 = vsel %vm179, %v136, 0
    %v196 = vsel %vm179, %v137, 0
    %v199 = vsel %vm179, %v138, 0
    %v202 = vsel %vm179, %v139, 0
    %204 = vmatprep.subr.bf16.mxu0 0
    %205 = vmatpush1.bf16.msra.mxu0 0
    %206 = vmatprep.subr.bf16.mxu0 0
    %207 = vmatpush1.bf16.msra.mxu0 0
    %208 = vmatprep.subr.bf16.mxu0 0
    %209 = vmatpush1.bf16.msra.mxu0 0
    %210 = vmatprep.subr.bf16.mxu0 0
    %211 = vmatpush1.bf16.msra.mxu0 0
    %212 = vmatprep.subr.bf16.mxu0 0
    %213 = vmatpush1.bf16.msra.mxu0 %v174
    %214 = vmatprep.subr.bf16.mxu0 0
    %215 = vmatpush1.bf16.msra.mxu0 %v173
    %216 = vmatprep.subr.bf16.mxu0 0
    %217 = vmatpush1.bf16.msra.mxu0 %v172
    %218 = vmatprep.subr.bf16.mxu0 0
    %219 = vmatpush1.bf16.msra.mxu0 %v171
    %220 = vmatprep.subr.bf16.mxu0 0
    %221 = vmatpush2.bf16.msra.mxu0 0
    %222 = vmatprep.subr.bf16.mxu0 0
    %223 = vmatpush2.bf16.msra.mxu0 0
    %224 = vmatprep.subr.bf16.mxu0 0
    %225 = vmatpush2.bf16.msra.mxu0 0
    %226 = vmatprep.subr.bf16.mxu0 0
    %227 = vmatpush2.bf16.msra.mxu0 0
    %228 = vmatprep.subr.bf16.mxu0 0
    %229 = vmatpush2.bf16.msra.mxu0 0
    %230 = vmatprep.subr.bf16.mxu0 0
    %231 = vmatpush2.bf16.msra.mxu0 0
    %232 = vmatprep.subr.bf16.mxu0 0
    %233 = vmatpush2.bf16.msra.mxu0 0
    %234 = vmatprep.subr.bf16.mxu0 0
    %235 = vmatpush2.bf16.msra.mxu0 0
    %236 = vmatprep.mubr.bf16.mxu0 0
    %237 = vmatmul.mubr.bf16.gmra.mxu0 %v181
    %v238 = vpop.f32.mrf.mxu0
    %v239 = vadd.f32 %v153, %v238
    %v240 = vpop.f32.mrf.mxu0
    %v241 = vpop.f32.mrf.mxu0
    %v242 = vadd.f32 %v153, %v241
    %v243 = vpop.f32.mrf.mxu0
    %244 = vmatprep.mubr.bf16.mxu0 0
    %245 = vmatmul.mubr.bf16.gmra.mxu0 %v184
    %v246 = vpop.f32.mrf.mxu0
    %v247 = vadd.f32 %v153, %v246
    %v248 = vpop.f32.mrf.mxu0
    %v249 = vpop.f32.mrf.mxu0
    %v250 = vadd.f32 %v153, %v249
    %v251 = vpop.f32.mrf.mxu0
    %252 = vmatprep.mubr.bf16.mxu0 0
    %253 = vmatmul.mubr.bf16.gmra.mxu0 %v187
    %v254 = vpop.f32.mrf.mxu0
    %v255 = vadd.f32 %v153, %v254
    %v256 = vpop.f32.mrf.mxu0
    %v257 = vpop.f32.mrf.mxu0
    %v258 = vadd.f32 %v153, %v257
    %v259 = vpop.f32.mrf.mxu0
    %260 = vmatprep.mubr.bf16.mxu0 0
    %261 = vmatmul.mubr.bf16.gmra.mxu0 %v190
    %v262 = vpop.f32.mrf.mxu0
    %v263 = vadd.f32 %v153, %v262
    %v264 = vpop.f32.mrf.mxu0
    %v265 = vpop.f32.mrf.mxu0
    %v266 = vadd.f32 %v153, %v265
    %v267 = vpop.f32.mrf.mxu0
    %268 = vmatprep.mubr.bf16.mxu0 0
    %269 = vmatmul.mubr.bf16.gmra.mxu0 %v193
    %v270 = vpop.f32.mrf.mxu0
    %v271 = vadd.f32 %v153, %v270
    %v272 = vpop.f32.mrf.mxu0
    %v273 = vpop.f32.mrf.mxu0
    %v274 = vadd.f32 %v153, %v273
    %v275 = vpop.f32.mrf.mxu0
    %276 = vmatprep.mubr.bf16.mxu0 0
    %277 = vmatmul.mubr.bf16.gmra.mxu0 %v196
    %v278 = vpop.f32.mrf.mxu0
    %v279 = vadd.f32 %v153, %v278
    %v280 = vpop.f32.mrf.mxu0
    %v281 = vpop.f32.mrf.mxu0
    %v282 = vadd.f32 %v153, %v281
    %v283 = vpop.f32.mrf.mxu0
    %284 = vmatprep.mubr.bf16.mxu0 0
    %285 = vmatmul.mubr.bf16.gmra.mxu0 %v199
    %v286 = vpop.f32.mrf.mxu0
    %v287 = vadd.f32 %v153, %v286
    %v288 = vpop.f32.mrf.mxu0
    %v289 = vpop.f32.mrf.mxu0
    %v290 = vadd.f32 %v153, %v289
    %v291 = vpop.f32.mrf.mxu0
    %292 = vmatprep.mubr.bf16.mxu0 0
    %293 = vmatmul.mubr.bf16.gmra.mxu0 %v202
    %v294 = vpop.f32.mrf.mxu0
    %v295 = vadd.f32 %v153, %v294
    %v296 = vpop.f32.mrf.mxu0
    %v297 = vpop.f32.mrf.mxu0
    %v298 = vadd.f32 %v153, %v297
    %v299 = vpop.f32.mrf.mxu0
    %300 = vdwg.mxu0
    %v301 = vld [vmem:[#allocation7] sm:$0xf]
    %v302 = vld [vmem:[#allocation7 + $0x4] sm:$0xf]
    %v303 = vld [vmem:[#allocation7 + $0x8] sm:$0xf]
    %v304 = vld [vmem:[#allocation7 + $0xc] sm:$0xf]
    %v305 = vld [vmem:[#allocation7 + $0x10] sm:$0xf]
    %v306 = vld [vmem:[#allocation7 + $0x14] sm:$0xf]
    %v307 = vld [vmem:[#allocation7 + $0x18] sm:$0xf]
    %v308 = vld [vmem:[#allocation7 + $0x1c] sm:$0xf]
    %v309 = vld [vmem:[%s4] sm:$0x1]
    %v311 = vlaneseq
    %v312 = vshrl.u32 %v311, 7
    %v313 = vsub.s32 0, %v312
    %v314 = vrot.slane %v309, %v313
    %v324 = vunpack.c.l.b16 %v301
    %v325 = vunpack.c.l.b16 %v302
    %v326 = vunpack.c.l.b16 %v303
    %v327 = vunpack.c.l.b16 %v304
    %v328 = vunpack.c.l.b16 %v305
    %v329 = vunpack.c.l.b16 %v306
    %v330 = vunpack.c.l.b16 %v307
    %v331 = vunpack.c.l.b16 %v308
    %v332 = vpack.c.b16 %v325, %v324
    %v333 = vpack.c.b16 %v327, %v326
    %v334 = vpack.c.b16 %v329, %v328
    %v335 = vpack.c.b16 %v331, %v330
    %340 = vmatprep.subr.bf16.mxu0 0
    %341 = vmatpush1.bf16.msra.mxu0 0
    %342 = vmatprep.subr.bf16.mxu0 0
    %343 = vmatpush1.bf16.msra.mxu0 0
    %344 = vmatprep.subr.bf16.mxu0 0
    %345 = vmatpush1.bf16.msra.mxu0 0
    %346 = vmatprep.subr.bf16.mxu0 0
    %347 = vmatpush1.bf16.msra.mxu0 0
    %348 = vmatprep.subr.bf16.mxu0 0
    %349 = vmatpush1.bf16.msra.mxu0 %v335
    %350 = vmatprep.subr.bf16.mxu0 0
    %351 = vmatpush1.bf16.msra.mxu0 %v334
    %352 = vmatprep.subr.bf16.mxu0 0
    %353 = vmatpush1.bf16.msra.mxu0 %v333
    %354 = vmatprep.subr.bf16.mxu0 0
    %355 = vmatpush1.bf16.msra.mxu0 %v332
    %356 = vmatprep.subr.bf16.mxu0 0
    %357 = vmatpush2.bf16.msra.mxu0 0
    %358 = vmatprep.subr.bf16.mxu0 0
    %359 = vmatpush2.bf16.msra.mxu0 0
    %360 = vmatprep.subr.bf16.mxu0 0
    %361 = vmatpush2.bf16.msra.mxu0 0
    %362 = vmatprep.subr.bf16.mxu0 0
    %363 = vmatpush2.bf16.msra.mxu0 0
    %364 = vmatprep.subr.bf16.mxu0 0
    %365 = vmatpush2.bf16.msra.mxu0 0
    %366 = vmatprep.subr.bf16.mxu0 0
    %367 = vmatpush2.bf16.msra.mxu0 0
    %368 = vmatprep.subr.bf16.mxu0 0
    %369 = vmatpush2.bf16.msra.mxu0 0
    %370 = vmatprep.subr.bf16.mxu0 0
    %371 = vmatpush2.bf16.msra.mxu0 0
    %372 = vmatprep.mubr.bf16.mxu0 0
    %373 = vmatmul.mubr.bf16.gmra.mxu0 %v181
    %v374 = vpop.f32.mrf.mxu0
    %v375 = vadd.f32 %v314, %v374
    %v376 = vpop.f32.mrf.mxu0
    %v377 = vpop.f32.mrf.mxu0
    %v378 = vadd.f32 %v314, %v377
    %v379 = vpop.f32.mrf.mxu0
    %380 = vmatprep.mubr.bf16.mxu0 0
    %381 = vmatmul.mubr.bf16.gmra.mxu0 %v184
    %v382 = vpop.f32.mrf.mxu0
    %v383 = vadd.f32 %v314, %v382
    %v384 = vpop.f32.mrf.mxu0
    %v385 = vpop.f32.mrf.mxu0
    %v386 = vadd.f32 %v314, %v385
    %v387 = vpop.f32.mrf.mxu0
    %388 = vmatprep.mubr.bf16.mxu0 0
    %389 = vmatmul.mubr.bf16.gmra.mxu0 %v187
    %v390 = vpop.f32.mrf.mxu0
    %v391 = vadd.f32 %v314, %v390
    %v392 = vpop.f32.mrf.mxu0
    %v393 = vpop.f32.mrf.mxu0
    %v394 = vadd.f32 %v314, %v393
    %v395 = vpop.f32.mrf.mxu0
    %396 = vmatprep.mubr.bf16.mxu0 0
    %397 = vmatmul.mubr.bf16.gmra.mxu0 %v190
    %v398 = vpop.f32.mrf.mxu0
    %v399 = vadd.f32 %v314, %v398
    %v400 = vpop.f32.mrf.mxu0
    %v401 = vpop.f32.mrf.mxu0
    %v402 = vadd.f32 %v314, %v401
    %v403 = vpop.f32.mrf.mxu0
    %404 = vmatprep.mubr.bf16.mxu0 0
    %405 = vmatmul.mubr.bf16.gmra.mxu0 %v193
    %v406 = vpop.f32.mrf.mxu0
    %v407 = vadd.f32 %v314, %v406
    %v408 = vpop.f32.mrf.mxu0
    %v409 = vpop.f32.mrf.mxu0
    %v410 = vadd.f32 %v314, %v409
    %v411 = vpop.f32.mrf.mxu0
    %412 = vmatprep.mubr.bf16.mxu0 0
    %413 = vmatmul.mubr.bf16.gmra.mxu0 %v196
    %v414 = vpop.f32.mrf.mxu0
    %v415 = vadd.f32 %v314, %v414
    %v416 = vpop.f32.mrf.mxu0
    %v417 = vpop.f32.mrf.mxu0
    %v418 = vadd.f32 %v314, %v417
    %v419 = vpop.f32.mrf.mxu0
    %420 = vmatprep.mubr.bf16.mxu0 0
    %421 = vmatmul.mubr.bf16.gmra.mxu0 %v199
    %v422 = vpop.f32.mrf.mxu0
    %v423 = vadd.f32 %v314, %v422
    %v424 = vpop.f32.mrf.mxu0
    %v425 = vpop.f32.mrf.mxu0
    %v426 = vadd.f32 %v314, %v425
    %v427 = vpop.f32.mrf.mxu0
    %428 = vmatprep.mubr.bf16.mxu0 0
    %429 = vmatmul.mubr.bf16.gmra.mxu0 %v202
    %v430 = vpop.f32.mrf.mxu0
    %v431 = vadd.f32 %v314, %v430
    %v432 = vpop.f32.mrf.mxu0
    %v433 = vpop.f32.mrf.mxu0
    %v434 = vadd.f32 %v314, %v433
    %v435 = vpop.f32.mrf.mxu0
    %436 = vdwg.mxu0
    %v437 = vld [vmem:[#allocation8] sm:$0xf]
    %v438 = vld [vmem:[#allocation8 + $0x4] sm:$0xf]
    %v439 = vld [vmem:[#allocation8 + $0x8] sm:$0xf]
    %v440 = vld [vmem:[#allocation8 + $0xc] sm:$0xf]
    %v441 = vld [vmem:[#allocation8 + $0x10] sm:$0xf]
    %v442 = vld [vmem:[#allocation8 + $0x14] sm:$0xf]
    %v443 = vld [vmem:[#allocation8 + $0x18] sm:$0xf]
    %v444 = vld [vmem:[#allocation8 + $0x1c] sm:$0xf]
    %v445 = vld [vmem:[%s6] sm:$0x1]
    %v447 = vlaneseq
    %v448 = vshrl.u32 %v447, 7
    %v449 = vsub.s32 0, %v448
    %v450 = vrot.slane %v445, %v449
    %v460 = vunpack.c.l.b16 %v437
    %v461 = vunpack.c.l.b16 %v438
    %v462 = vunpack.c.l.b16 %v439
    %v463 = vunpack.c.l.b16 %v440
    %v464 = vunpack.c.l.b16 %v441
    %v465 = vunpack.c.l.b16 %v442
    %v466 = vunpack.c.l.b16 %v443
    %v467 = vunpack.c.l.b16 %v444
    %v468 = vpack.c.b16 %v461, %v460
    %v469 = vpack.c.b16 %v463, %v462
    %v470 = vpack.c.b16 %v465, %v464
    %v471 = vpack.c.b16 %v467, %v466
    %476 = vmatprep.subr.bf16.mxu0 0
    %477 = vmatpush1.bf16.msra.mxu0 0
    %478 = vmatprep.subr.bf16.mxu0 0
    %479 = vmatpush1.bf16.msra.mxu0 0
    %480 = vmatprep.subr.bf16.mxu0 0
    %481 = vmatpush1.bf16.msra.mxu0 0
    %482 = vmatprep.subr.bf16.mxu0 0
    %483 = vmatpush1.bf16.msra.mxu0 0
    %484 = vmatprep.subr.bf16.mxu0 0
    %485 = vmatpush1.bf16.msra.mxu0 %v471
    %486 = vmatprep.subr.bf16.mxu0 0
    %487 = vmatpush1.bf16.msra.mxu0 %v470
    %488 = vmatprep.subr.bf16.mxu0 0
    %489 = vmatpush1.bf16.msra.mxu0 %v469
    %490 = vmatprep.subr.bf16.mxu0 0
    %491 = vmatpush1.bf16.msra.mxu0 %v468
    %492 = vmatprep.subr.bf16.mxu0 0
    %493 = vmatpush2.bf16.msra.mxu0 0
    %494 = vmatprep.subr.bf16.mxu0 0
    %495 = vmatpush2.bf16.msra.mxu0 0
    %496 = vmatprep.subr.bf16.mxu0 0
    %497 = vmatpush2.bf16.msra.mxu0 0
    %498 = vmatprep.subr.bf16.mxu0 0
    %499 = vmatpush2.bf16.msra.mxu0 0
    %500 = vmatprep.subr.bf16.mxu0 0
    %501 = vmatpush2.bf16.msra.mxu0 0
    %502 = vmatprep.subr.bf16.mxu0 0
    %503 = vmatpush2.bf16.msra.mxu0 0
    %504 = vmatprep.subr.bf16.mxu0 0
    %505 = vmatpush2.bf16.msra.mxu0 0
    %506 = vmatprep.subr.bf16.mxu0 0
    %507 = vmatpush2.bf16.msra.mxu0 0
    %508 = vmatprep.mubr.bf16.mxu0 0
    %509 = vmatmul.mubr.bf16.gmra.mxu0 %v181
    %v510 = vpop.f32.mrf.mxu0
    %v511 = vadd.f32 %v450, %v510
    %v512 = vpop.f32.mrf.mxu0
    %v513 = vpop.f32.mrf.mxu0
    %v514 = vadd.f32 %v450, %v513
    %v515 = vpop.f32.mrf.mxu0
    %516 = vmatprep.mubr.bf16.mxu0 0
    %517 = vmatmul.mubr.bf16.gmra.mxu0 %v184
    %v518 = vpop.f32.mrf.mxu0
    %v519 = vadd.f32 %v450, %v518
    %v520 = vpop.f32.mrf.mxu0
    %v521 = vpop.f32.mrf.mxu0
    %v522 = vadd.f32 %v450, %v521
    %v523 = vpop.f32.mrf.mxu0
    %524 = vmatprep.mubr.bf16.mxu0 0
    %525 = vmatmul.mubr.bf16.gmra.mxu0 %v187
    %v526 = vpop.f32.mrf.mxu0
    %v527 = vadd.f32 %v450, %v526
    %v528 = vpop.f32.mrf.mxu0
    %v529 = vpop.f32.mrf.mxu0
    %v530 = vadd.f32 %v450, %v529
    %v531 = vpop.f32.mrf.mxu0
    %532 = vmatprep.mubr.bf16.mxu0 0
    %533 = vmatmul.mubr.bf16.gmra.mxu0 %v190
    %v534 = vpop.f32.mrf.mxu0
    %v535 = vadd.f32 %v450, %v534
    %v536 = vpop.f32.mrf.mxu0
    %v537 = vpop.f32.mrf.mxu0
    %v538 = vadd.f32 %v450, %v537
    %v539 = vpop.f32.mrf.mxu0
    %540 = vmatprep.mubr.bf16.mxu0 0
    %541 = vmatmul.mubr.bf16.gmra.mxu0 %v193
    %v542 = vpop.f32.mrf.mxu0
    %v543 = vadd.f32 %v450, %v542
    %v544 = vpop.f32.mrf.mxu0
    %v545 = vpop.f32.mrf.mxu0
    %v546 = vadd.f32 %v450, %v545
    %v547 = vpop.f32.mrf.mxu0
    %548 = vmatprep.mubr.bf16.mxu0 0
    %549 = vmatmul.mubr.bf16.gmra.mxu0 %v196
    %v550 = vpop.f32.mrf.mxu0
    %v551 = vadd.f32 %v450, %v550
    %v552 = vpop.f32.mrf.mxu0
    %v553 = vpop.f32.mrf.mxu0
    %v554 = vadd.f32 %v450, %v553
    %v555 = vpop.f32.mrf.mxu0
    %556 = vmatprep.mubr.bf16.mxu0 0
    %557 = vmatmul.mubr.bf16.gmra.mxu0 %v199
    %v558 = vpop.f32.mrf.mxu0
    %v559 = vadd.f32 %v450, %v558
    %v560 = vpop.f32.mrf.mxu0
    %v561 = vpop.f32.mrf.mxu0
    %v562 = vadd.f32 %v450, %v561
    %v563 = vpop.f32.mrf.mxu0
    %564 = vmatprep.mubr.bf16.mxu0 0
    %565 = vmatmul.mubr.bf16.gmra.mxu0 %v202
    %v566 = vpop.f32.mrf.mxu0
    %v567 = vadd.f32 %v450, %v566
    %v568 = vpop.f32.mrf.mxu0
    %v569 = vpop.f32.mrf.mxu0
    %v570 = vadd.f32 %v450, %v569
    %v571 = vpop.f32.mrf.mxu0
    %572 = vdwg.mxu0
    %v573 = vpack.c.bf16 %v242, %v239
    %v574 = vpack.c.bf16 %v250, %v247
    %v575 = vpack.c.bf16 %v258, %v255
    %v576 = vpack.c.bf16 %v266, %v263
    %v577 = vpack.c.bf16 %v274, %v271
    %v578 = vpack.c.bf16 %v282, %v279
    %v579 = vpack.c.bf16 %v290, %v287
    %v580 = vpack.c.bf16 %v298, %v295
    %v581 = vpack.c.bf16 %v378, %v375
    %v582 = vpack.c.bf16 %v386, %v383
    %v583 = vpack.c.bf16 %v394, %v391
    %v584 = vpack.c.bf16 %v402, %v399
    %v585 = vpack.c.bf16 %v410, %v407
    %v586 = vpack.c.bf16 %v418, %v415
    %v587 = vpack.c.bf16 %v426, %v423
    %v588 = vpack.c.bf16 %v434, %v431
    %593 = vrot.lane.b32.xlu0 %v573, 120
    %v594 = vpop.permute.xlu0 %593
    %595 = vrot.lane.b32.xlu0 %v574, 120
    %v596 = vpop.permute.xlu0 %595
    %597 = vrot.lane.b32.xlu0 %v575, 120
    %v598 = vpop.permute.xlu0 %597
    %599 = vrot.lane.b32.xlu0 %v576, 120
    %v600 = vpop.permute.xlu0 %599
    %vm601 = vcmask 64512
    %v603 = vsel %vm601, %v573, 0
    %v606 = vsel %vm601, %v574, 0
    %v609 = vsel %vm601, %v575, 0
    %v612 = vsel %vm601, %v576, 0
    %v615 = vsel %vm601, %v594, 0
    %v618 = vsel %vm601, %v596, 0
    %v621 = vsel %vm601, %v598, 0
    %v624 = vsel %vm601, %v600, 0
    %626 = vmatprep.subr.bf16.mxu0 0
    %627 = vmatpush1.bf16.xpose.msra.mxu0 0
    %628 = vmatprep.subr.bf16.mxu0 0
    %629 = vmatpush1.bf16.xpose.msra.mxu0 0
    %630 = vmatprep.subr.bf16.mxu0 0
    %631 = vmatpush1.bf16.xpose.msra.mxu0 0
    %632 = vmatprep.subr.bf16.mxu0 0
    %633 = vmatpush1.bf16.xpose.msra.mxu0 0
    %634 = vmatprep.subr.bf16.mxu0 0
    %635 = vmatpush1.bf16.xpose.msra.mxu0 %v624
    %636 = vmatprep.subr.bf16.mxu0 0
    %637 = vmatpush1.bf16.xpose.msra.mxu0 %v621
    %638 = vmatprep.subr.bf16.mxu0 0
    %639 = vmatpush1.bf16.xpose.msra.mxu0 %v618
    %640 = vmatprep.subr.bf16.mxu0 0
    %641 = vmatpush1.bf16.xpose.msra.mxu0 %v615
    %642 = vmatprep.subr.bf16.mxu0 0
    %643 = vmatpush2.bf16.xpose.msra.mxu0 0
    %644 = vmatprep.subr.bf16.mxu0 0
    %645 = vmatpush2.bf16.xpose.msra.mxu0 0
    %646 = vmatprep.subr.bf16.mxu0 0
    %647 = vmatpush2.bf16.xpose.msra.mxu0 0
    %648 = vmatprep.subr.bf16.mxu0 0
    %649 = vmatpush2.bf16.xpose.msra.mxu0 0
    %650 = vmatprep.subr.bf16.mxu0 0
    %651 = vmatpush2.bf16.xpose.msra.mxu0 0
    %652 = vmatprep.subr.bf16.mxu0 0
    %653 = vmatpush2.bf16.xpose.msra.mxu0 0
    %654 = vmatprep.subr.bf16.mxu0 0
    %655 = vmatpush2.bf16.xpose.msra.mxu0 0
    %656 = vmatprep.subr.bf16.mxu0 0
    %657 = vmatpush2.bf16.xpose.msra.mxu0 0
    %658 = vmatprep.mubr.bf16.mxu0 0
    %659 = vmatmul.mubr.bf16.gmra.mxu0 %v603
    %v660 = vpop.f32.mrf.mxu0
    %v661 = vadd.f32 0.0, %v660
    %v662 = vpop.f32.mrf.mxu0
    %v663 = vpop.f32.mrf.mxu0
    %v664 = vadd.f32 0.0, %v663
    %v665 = vpop.f32.mrf.mxu0
    %666 = vmatprep.mubr.bf16.mxu0 0
    %667 = vmatmul.mubr.bf16.gmra.mxu0 %v606
    %v668 = vpop.f32.mrf.mxu0
    %v669 = vadd.f32 0.0, %v668
    %v670 = vpop.f32.mrf.mxu0
    %v671 = vpop.f32.mrf.mxu0
    %v672 = vadd.f32 0.0, %v671
    %v673 = vpop.f32.mrf.mxu0
    %674 = vmatprep.mubr.bf16.mxu0 0
    %675 = vmatmul.mubr.bf16.gmra.mxu0 %v609
    %v676 = vpop.f32.mrf.mxu0
    %v677 = vadd.f32 0.0, %v676
    %v678 = vpop.f32.mrf.mxu0
    %v679 = vpop.f32.mrf.mxu0
    %v680 = vadd.f32 0.0, %v679
    %v681 = vpop.f32.mrf.mxu0
    %682 = vmatprep.mubr.bf16.mxu0 0
    %683 = vmatmul.mubr.bf16.gmra.mxu0 %v612
    %v684 = vpop.f32.mrf.mxu0
    %v685 = vadd.f32 0.0, %v684
    %v686 = vpop.f32.mrf.mxu0
    %v687 = vpop.f32.mrf.mxu0
    %v688 = vadd.f32 0.0, %v687
    %v689 = vpop.f32.mrf.mxu0
    %690 = vdwg.mxu0
    %v691 = vsel %vm179, %v661, -inf
    %692 = vmax.xlane.f32.xlu0 %v691
    %v693 = vpop.xlane.xlu0 %692
    %v694 = vsel %vm179, %v664, -inf
    %695 = vmax.xlane.f32.xlu0 %v694
    %v696 = vpop.xlane.xlu0 %695
    %v697 = vsel %vm179, %v669, -inf
    %698 = vmax.xlane.f32.xlu0 %v697
    %v699 = vpop.xlane.xlu0 %698
    %v700 = vsel %vm179, %v672, -inf
    %701 = vmax.xlane.f32.xlu0 %v700
    %v702 = vpop.xlane.xlu0 %701
    %v703 = vsel %vm179, %v677, -inf
    %704 = vmax.xlane.f32.xlu0 %v703
    %v705 = vpop.xlane.xlu0 %704
    %v706 = vsel %vm179, %v680, -inf
    %707 = vmax.xlane.f32.xlu0 %v706
    %v708 = vpop.xlane.xlu0 %707
    %v709 = vsel %vm179, %v685, -inf
    %710 = vmax.xlane.f32.xlu0 %v709
    %v711 = vpop.xlane.xlu0 %710
    %v712 = vsel %vm179, %v688, -inf
    %713 = vmax.xlane.f32.xlu0 %v712
    %v714 = vpop.xlane.xlu0 %713
    %v715 = vsub.f32 %v661, %v693
    %v716 = vsub.f32 %v664, %v696
    %v717 = vsub.f32 %v669, %v699
    %v718 = vsub.f32 %v672, %v702
    %v719 = vsub.f32 %v677, %v705
    %v720 = vsub.f32 %v680, %v708
    %v721 = vsub.f32 %v685, %v711
    %v722 = vsub.f32 %v688, %v714
    %v723 = vmul.f32 %v715, 1.442695
    %v724 = vpow.pop %v723
    %v725 = vmul.f32 %v716, 1.442695
    %v726 = vpow.pop %v725
    %v727 = vmul.f32 %v717, 1.442695
    %v728 = vpow.pop %v727
    %v729 = vmul.f32 %v718, 1.442695
    %v730 = vpow.pop %v729
    %v731 = vmul.f32 %v719, 1.442695
    %v732 = vpow.pop %v731
    %v733 = vmul.f32 %v720, 1.442695
    %v734 = vpow.pop %v733
    %v735 = vmul.f32 %v721, 1.442695
    %v736 = vpow.pop %v735
    %v737 = vmul.f32 %v722, 1.442695
    %v738 = vpow.pop %v737
    %v739 = vsel %vm179, %v724, 0.0
    %740 = vadd.xlane.f32.xlu0 %v739
    %v741 = vpop.xlane.xlu0 %740
    %v742 = vsel %vm179, %v726, 0.0
    %743 = vadd.xlane.f32.xlu0 %v742
    %v744 = vpop.xlane.xlu0 %743
    %v745 = vsel %vm179, %v728, 0.0
    %746 = vadd.xlane.f32.xlu0 %v745
    %v747 = vpop.xlane.xlu0 %746
    %v748 = vsel %vm179, %v730, 0.0
    %749 = vadd.xlane.f32.xlu0 %v748
    %v750 = vpop.xlane.xlu0 %749
    %v751 = vsel %vm179, %v732, 0.0
    %752 = vadd.xlane.f32.xlu0 %v751
    %v753 = vpop.xlane.xlu0 %752
    %v754 = vsel %vm179, %v734, 0.0
    %755 = vadd.xlane.f32.xlu0 %v754
    %v756 = vpop.xlane.xlu0 %755
    %v757 = vsel %vm179, %v736, 0.0
    %758 = vadd.xlane.f32.xlu0 %v757
    %v759 = vpop.xlane.xlu0 %758
    %v760 = vsel %vm179, %v738, 0.0
    %761 = vadd.xlane.f32.xlu0 %v760
    %v762 = vpop.xlane.xlu0 %761
    %v763 = vrcp.pop %v741
    %v764 = vrcp.pop %v744
    %v765 = vrcp.pop %v747
    %v766 = vrcp.pop %v750
    %v767 = vrcp.pop %v753
    %v768 = vrcp.pop %v756
    %v769 = vrcp.pop %v759
    %v770 = vrcp.pop %v762
    %v771 = vmul.f32 %v724, %v763
    %v772 = vmul.f32 %v726, %v764
    %v773 = vmul.f32 %v728, %v765
    %v774 = vmul.f32 %v730, %v766
    %v775 = vmul.f32 %v732, %v767
    %v776 = vmul.f32 %v734, %v768
    %v777 = vmul.f32 %v736, %v769
    %v778 = vmul.f32 %v738, %v770
    %v779 = vpack.c.bf16 %v772, %v771
    %v780 = vpack.c.bf16 %v774, %v773
    %v781 = vpack.c.bf16 %v776, %v775
    %v782 = vpack.c.bf16 %v778, %v777
    %v784 = vsel %vm179, %v779, 0
    %v787 = vsel %vm179, %v780, 0
    %v790 = vsel %vm179, %v781, 0
    %v793 = vsel %vm179, %v782, 0
    %795 = vmatprep.subr.bf16.mxu0 0
    %796 = vmatpush1.bf16.msra.mxu0 0
    %797 = vmatprep.subr.bf16.mxu0 0
    %798 = vmatpush1.bf16.msra.mxu0 0
    %799 = vmatprep.subr.bf16.mxu0 0
    %800 = vmatpush1.bf16.msra.mxu0 0
    %801 = vmatprep.subr.bf16.mxu0 0
    %802 = vmatpush1.bf16.msra.mxu0 0
    %803 = vmatprep.subr.bf16.mxu0 0
    %804 = vmatpush1.bf16.msra.mxu0 %v584
    %805 = vmatprep.subr.bf16.mxu0 0
    %806 = vmatpush1.bf16.msra.mxu0 %v583
    %807 = vmatprep.subr.bf16.mxu0 0
    %808 = vmatpush1.bf16.msra.mxu0 %v582
    %809 = vmatprep.subr.bf16.mxu0 0
    %810 = vmatpush1.bf16.msra.mxu0 %v581
    %811 = vmatprep.subr.bf16.mxu0 0
    %812 = vmatpush2.bf16.msra.mxu0 0
    %813 = vmatprep.subr.bf16.mxu0 0
    %814 = vmatpush2.bf16.msra.mxu0 0
    %815 = vmatprep.subr.bf16.mxu0 0
    %816 = vmatpush2.bf16.msra.mxu0 0
    %817 = vmatprep.subr.bf16.mxu0 0
    %818 = vmatpush2.bf16.msra.mxu0 0
    %819 = vmatprep.subr.bf16.mxu0 0
    %820 = vmatpush2.bf16.msra.mxu0 0
    %821 = vmatprep.subr.bf16.mxu0 0
    %822 = vmatpush2.bf16.msra.mxu0 0
    %823 = vmatprep.subr.bf16.mxu0 0
    %824 = vmatpush2.bf16.msra.mxu0 0
    %825 = vmatprep.subr.bf16.mxu0 0
    %826 = vmatpush2.bf16.msra.mxu0 0
    %827 = vmatprep.mubr.bf16.mxu0 0
    %828 = vmatmul.mubr.bf16.gmra.mxu0 %v784
    %v829 = vpop.f32.mrf.mxu0
    %v830 = vadd.f32 0.0, %v829
    %v831 = vpop.f32.mrf.mxu0
    %v832 = vpop.f32.mrf.mxu0
    %v833 = vadd.f32 0.0, %v832
    %v834 = vpop.f32.mrf.mxu0
    %835 = vmatprep.mubr.bf16.mxu0 0
    %836 = vmatmul.mubr.bf16.gmra.mxu0 %v787
    %v837 = vpop.f32.mrf.mxu0
    %v838 = vadd.f32 0.0, %v837
    %v839 = vpop.f32.mrf.mxu0
    %v840 = vpop.f32.mrf.mxu0
    %v841 = vadd.f32 0.0, %v840
    %v842 = vpop.f32.mrf.mxu0
    %843 = vmatprep.mubr.bf16.mxu0 0
    %844 = vmatmul.mubr.bf16.gmra.mxu0 %v790
    %v845 = vpop.f32.mrf.mxu0
    %v846 = vadd.f32 0.0, %v845
    %v847 = vpop.f32.mrf.mxu0
    %v848 = vpop.f32.mrf.mxu0
    %v849 = vadd.f32 0.0, %v848
    %v850 = vpop.f32.mrf.mxu0
    %851 = vmatprep.mubr.bf16.mxu0 0
    %852 = vmatmul.mubr.bf16.gmra.mxu0 %v793
    %v853 = vpop.f32.mrf.mxu0
    %v854 = vadd.f32 0.0, %v853
    %v855 = vpop.f32.mrf.mxu0
    %v856 = vpop.f32.mrf.mxu0
    %v857 = vadd.f32 0.0, %v856
    %v858 = vpop.f32.mrf.mxu0
    %859 = vdwg.mxu0
    %860 = vxpose.xlu0.c.b16.start [1/8] %v132, 128
    %861 = vxpose.xlu0.c.b16.cont [2/8] %v133, 128
    %862 = vxpose.xlu0.c.b16.cont [3/8] %v134, 128
    %863 = vxpose.xlu0.c.b16.cont [4/8] %v135, 128
    %864 = vxpose.xlu0.c.b16.cont [5/8] 0, 128
    %865 = vxpose.xlu0.c.b16.cont [6/8] 0, 128
    %866 = vxpose.xlu0.c.b16.cont [7/8] 0, 128
    %867 = vxpose.xlu0.c.b16.end [8/8] 0, 128
    %v868 = vpop.trf.xlu0
    %v869 = vpop.trf.xlu0
    %v870 = vpop.trf.xlu0
    %v871 = vpop.trf.xlu0
    %v872 = vpop.trf.xlu0
    %v873 = vpop.trf.xlu0
    %v874 = vpop.trf.xlu0
    %v875 = vpop.trf.xlu0
    %v877 = vsel %vm179, %v868, 0
    %v880 = vsel %vm179, %v869, 0
    %v883 = vsel %vm179, %v870, 0
    %v886 = vsel %vm179, %v871, 0
    %888 = vmatprep.subr.bf16.mxu0 0
    %889 = vmatpush1.bf16.msra.mxu0 0
    %890 = vmatprep.subr.bf16.mxu0 0
    %891 = vmatpush1.bf16.msra.mxu0 0
    %892 = vmatprep.subr.bf16.mxu0 0
    %893 = vmatpush1.bf16.msra.mxu0 0
    %894 = vmatprep.subr.bf16.mxu0 0
    %895 = vmatpush1.bf16.msra.mxu0 0
    %896 = vmatprep.subr.bf16.mxu0 0
    %897 = vmatpush1.bf16.msra.mxu0 %v135
    %898 = vmatprep.subr.bf16.mxu0 0
    %899 = vmatpush1.bf16.msra.mxu0 %v134
    %900 = vmatprep.subr.bf16.mxu0 0
    %901 = vmatpush1.bf16.msra.mxu0 %v133
    %902 = vmatprep.subr.bf16.mxu0 0
    %903 = vmatpush1.bf16.msra.mxu0 %v132
    %904 = vmatprep.subr.bf16.mxu0 0
    %905 = vmatpush2.bf16.msra.mxu0 0
    %906 = vmatprep.subr.bf16.mxu0 0
    %907 = vmatpush2.bf16.msra.mxu0 0
    %908 = vmatprep.subr.bf16.mxu0 0
    %909 = vmatpush2.bf16.msra.mxu0 0
    %910 = vmatprep.subr.bf16.mxu0 0
    %911 = vmatpush2.bf16.msra.mxu0 0
    %912 = vmatprep.subr.bf16.mxu0 0
    %913 = vmatpush2.bf16.msra.mxu0 0
    %914 = vmatprep.subr.bf16.mxu0 0
    %915 = vmatpush2.bf16.msra.mxu0 0
    %916 = vmatprep.subr.bf16.mxu0 0
    %917 = vmatpush2.bf16.msra.mxu0 0
    %918 = vmatprep.subr.bf16.mxu0 0
    %919 = vmatpush2.bf16.msra.mxu0 0
    %920 = vmatprep.mubr.bf16.mxu0 0
    %921 = vmatmul.mubr.bf16.gmra.mxu0 %v877
    %v922 = vpop.f32.mrf.mxu0
    %v923 = vadd.f32 0.0, %v922
    %v924 = vpop.f32.mrf.mxu0
    %v925 = vpop.f32.mrf.mxu0
    %v926 = vadd.f32 0.0, %v925
    %v927 = vpop.f32.mrf.mxu0
    %928 = vmatprep.mubr.bf16.mxu0 0
    %929 = vmatmul.mubr.bf16.gmra.mxu0 %v880
    %v930 = vpop.f32.mrf.mxu0
    %v931 = vadd.f32 0.0, %v930
    %v932 = vpop.f32.mrf.mxu0
    %v933 = vpop.f32.mrf.mxu0
    %v934 = vadd.f32 0.0, %v933
    %v935 = vpop.f32.mrf.mxu0
    %936 = vmatprep.mubr.bf16.mxu0 0
    %937 = vmatmul.mubr.bf16.gmra.mxu0 %v883
    %v938 = vpop.f32.mrf.mxu0
    %v939 = vadd.f32 0.0, %v938
    %v940 = vpop.f32.mrf.mxu0
    %v941 = vpop.f32.mrf.mxu0
    %v942 = vadd.f32 0.0, %v941
    %v943 = vpop.f32.mrf.mxu0
    %944 = vmatprep.mubr.bf16.mxu0 0
    %945 = vmatmul.mubr.bf16.gmra.mxu0 %v886
    %v946 = vpop.f32.mrf.mxu0
    %v947 = vadd.f32 0.0, %v946
    %v948 = vpop.f32.mrf.mxu0
    %v949 = vpop.f32.mrf.mxu0
    %v950 = vadd.f32 0.0, %v949
    %v951 = vpop.f32.mrf.mxu0
    %952 = vdwg.mxu0
    %v953 = vsel %vm179, %v923, -inf
    %v954 = vsel %vm179, %v926, -inf
    %v955 = vsel %vm179, %v931, -inf
    %v956 = vsel %vm179, %v934, -inf
    %v957 = vsel %vm179, %v939, -inf
    %v958 = vmax.f32 %v953, %v957
    %v959 = vsel %vm179, %v942, -inf
    %v960 = vmax.f32 %v954, %v959
    %v961 = vsel %vm179, %v947, -inf
    %v962 = vmax.f32 %v955, %v961
    %v963 = vsel %vm179, %v950, -inf
    %v964 = vmax.f32 %v956, %v963
    %v965 = vmax.f32 %v958, %v960
    %v966 = vmax.f32 %v962, %v964
    %v967 = vmax.f32 %v965, %v966
    %v968 = vrot.slane %v967, 4
    %v969 = vmax.f32 %v967, %v968
    %v970 = vrot.slane %v969, 2
    %v971 = vmax.f32 %v969, %v970
    %v972 = vrot.slane %v971, 1
    %v973 = vmax.f32 %v971, %v972
    %v974 = vsub.f32 %v923, %v973
    %v975 = vsub.f32 %v926, %v973
    %v976 = vsub.f32 %v931, %v973
    %v977 = vsub.f32 %v934, %v973
    %v978 = vsub.f32 %v939, %v973
    %v979 = vsub.f32 %v942, %v973
    %v980 = vsub.f32 %v947, %v973
    %v981 = vsub.f32 %v950, %v973
    %v982 = vmul.f32 %v974, 1.442695
    %v983 = vpow.pop %v982
    %v984 = vmul.f32 %v975, 1.442695
    %v985 = vpow.pop %v984
    %v986 = vmul.f32 %v976, 1.442695
    %v987 = vpow.pop %v986
    %v988 = vmul.f32 %v977, 1.442695
    %v989 = vpow.pop %v988
    %v990 = vmul.f32 %v978, 1.442695
    %v991 = vpow.pop %v990
    %v992 = vmul.f32 %v979, 1.442695
    %v993 = vpow.pop %v992
    %v994 = vmul.f32 %v980, 1.442695
    %v995 = vpow.pop %v994
    %v996 = vmul.f32 %v981, 1.442695
    %v997 = vpow.pop %v996
    %v998 = vsel %vm179, %v983, 0.0
    %v999 = vsel %vm179, %v985, 0.0
    %v1000 = vadd.f32 %v998, %v999
    %v1001 = vsel %vm179, %v987, 0.0
    %v1002 = vadd.f32 %v1000, %v1001
    %v1003 = vsel %vm179, %v989, 0.0
    %v1004 = vadd.f32 %v1002, %v1003
    %v1005 = vsel %vm179, %v991, 0.0
    %v1006 = vadd.f32 %v1004, %v1005
    %v1007 = vsel %vm179, %v993, 0.0
    %v1008 = vadd.f32 %v1006, %v1007
    %v1009 = vsel %vm179, %v995, 0.0
    %v1010 = vadd.f32 %v1008, %v1009
    %v1011 = vsel %vm179, %v997, 0.0
    %v1012 = vadd.f32 %v1010, %v1011
    %v1013 = vrot.slane %v1012, 4
    %v1014 = vadd.f32 %v1012, %v1013
    %v1015 = vrot.slane %v1014, 2
    %v1016 = vadd.f32 %v1014, %v1015
    %v1017 = vrot.slane %v1016, 1
    %v1018 = vadd.f32 %v1016, %v1017
    %v1019 = vrcp.pop %v1018
    %v1020 = vmul.f32 %v983, %v1019
    %v1021 = vmul.f32 %v985, %v1019
    %v1022 = vmul.f32 %v987, %v1019
    %v1023 = vmul.f32 %v989, %v1019
    %v1024 = vmul.f32 %v991, %v1019
    %v1025 = vmul.f32 %v993, %v1019
    %v1026 = vmul.f32 %v995, %v1019
    %v1027 = vmul.f32 %v997, %v1019
    %v1028 = vpack.c.bf16 %v1021, %v1020
    %v1029 = vpack.c.bf16 %v1023, %v1022
    %v1030 = vpack.c.bf16 %v1025, %v1024
    %v1031 = vpack.c.bf16 %v1027, %v1026
    %1032 = vmatprep.subr.bf16.mxu0 0
    %1033 = vmatpush1.bf16.msra.mxu0 0
    %1034 = vmatprep.subr.bf16.mxu0 0
    %1035 = vmatpush1.bf16.msra.mxu0 0
    %1036 = vmatprep.subr.bf16.mxu0 0
    %1037 = vmatpush1.bf16.msra.mxu0 0
    %1038 = vmatprep.subr.bf16.mxu0 0
    %1039 = vmatpush1.bf16.msra.mxu0 0
    %1040 = vmatprep.subr.bf16.mxu0 0
    %1041 = vmatpush1.bf16.msra.mxu0 %v1031
    %1042 = vmatprep.subr.bf16.mxu0 0
    %1043 = vmatpush1.bf16.msra.mxu0 %v1030
    %1044 = vmatprep.subr.bf16.mxu0 0
    %1045 = vmatpush1.bf16.msra.mxu0 %v1029
    %1046 = vmatprep.subr.bf16.mxu0 0
    %1047 = vmatpush1.bf16.msra.mxu0 %v1028
    %1048 = vmatprep.subr.bf16.mxu0 0
    %1049 = vmatpush2.bf16.msra.mxu0 0
    %1050 = vmatprep.subr.bf16.mxu0 0
    %1051 = vmatpush2.bf16.msra.mxu0 0
    %1052 = vmatprep.subr.bf16.mxu0 0
    %1053 = vmatpush2.bf16.msra.mxu0 0
    %1054 = vmatprep.subr.bf16.mxu0 0
    %1055 = vmatpush2.bf16.msra.mxu0 0
    %1056 = vmatprep.subr.bf16.mxu0 0
    %1057 = vmatpush2.bf16.msra.mxu0 0
    %1058 = vmatprep.subr.bf16.mxu0 0
    %1059 = vmatpush2.bf16.msra.mxu0 0
    %1060 = vmatprep.subr.bf16.mxu0 0
    %1061 = vmatpush2.bf16.msra.mxu0 0
    %1062 = vmatprep.subr.bf16.mxu0 0
    %1063 = vmatpush2.bf16.msra.mxu0 0
    %1064 = vmatprep.mubr.bf16.mxu0 0
    %1065 = vmatmul.mubr.bf16.gmra.mxu0 %v181
    %v1066 = vpop.f32.mrf.mxu0
    %v1067 = vadd.f32 0.0, %v1066
    %v1068 = vpop.f32.mrf.mxu0
    %v1069 = vpop.f32.mrf.mxu0
    %v1070 = vadd.f32 0.0, %v1069
    %v1071 = vpop.f32.mrf.mxu0
    %1072 = vmatprep.mubr.bf16.mxu0 0
    %1073 = vmatmul.mubr.bf16.gmra.mxu0 %v184
    %v1074 = vpop.f32.mrf.mxu0
    %v1075 = vadd.f32 0.0, %v1074
    %v1076 = vpop.f32.mrf.mxu0
    %v1077 = vpop.f32.mrf.mxu0
    %v1078 = vadd.f32 0.0, %v1077
    %v1079 = vpop.f32.mrf.mxu0
    %1080 = vmatprep.mubr.bf16.mxu0 0
    %1081 = vmatmul.mubr.bf16.gmra.mxu0 %v187
    %v1082 = vpop.f32.mrf.mxu0
    %v1083 = vadd.f32 0.0, %v1082
    %v1084 = vpop.f32.mrf.mxu0
    %v1085 = vpop.f32.mrf.mxu0
    %v1086 = vadd.f32 0.0, %v1085
    %v1087 = vpop.f32.mrf.mxu0
    %1088 = vmatprep.mubr.bf16.mxu0 0
    %1089 = vmatmul.mubr.bf16.gmra.mxu0 %v190
    %v1090 = vpop.f32.mrf.mxu0
    %v1091 = vadd.f32 0.0, %v1090
    %v1092 = vpop.f32.mrf.mxu0
    %v1093 = vpop.f32.mrf.mxu0
    %v1094 = vadd.f32 0.0, %v1093
    %v1095 = vpop.f32.mrf.mxu0
    %1096 = vdwg.mxu0
    %1101 = vrot.lane.b32.xlu0 %v577, 120
    %v1102 = vpop.permute.xlu0 %1101
    %1103 = vrot.lane.b32.xlu0 %v578, 120
    %v1104 = vpop.permute.xlu0 %1103
    %1105 = vrot.lane.b32.xlu0 %v579, 120
    %v1106 = vpop.permute.xlu0 %1105
    %1107 = vrot.lane.b32.xlu0 %v580, 120
    %v1108 = vpop.permute.xlu0 %1107
    %v1110 = vsel %vm601, %v577, 0
    %v1113 = vsel %vm601, %v578, 0
    %v1116 = vsel %vm601, %v579, 0
    %v1119 = vsel %vm601, %v580, 0
    %v1122 = vsel %vm601, %v1102, 0
    %v1125 = vsel %vm601, %v1104, 0
    %v1128 = vsel %vm601, %v1106, 0
    %v1131 = vsel %vm601, %v1108, 0
    %1133 = vmatprep.subr.bf16.mxu0 0
    %1134 = vmatpush1.bf16.xpose.msra.mxu0 0
    %1135 = vmatprep.subr.bf16.mxu0 0
    %1136 = vmatpush1.bf16.xpose.msra.mxu0 0
    %1137 = vmatprep.subr.bf16.mxu0 0
    %1138 = vmatpush1.bf16.xpose.msra.mxu0 0
    %1139 = vmatprep.subr.bf16.mxu0 0
    %1140 = vmatpush1.bf16.xpose.msra.mxu0 0
    %1141 = vmatprep.subr.bf16.mxu0 0
    %1142 = vmatpush1.bf16.xpose.msra.mxu0 %v1131
    %1143 = vmatprep.subr.bf16.mxu0 0
    %1144 = vmatpush1.bf16.xpose.msra.mxu0 %v1128
    %1145 = vmatprep.subr.bf16.mxu0 0
    %1146 = vmatpush1.bf16.xpose.msra.mxu0 %v1125
    %1147 = vmatprep.subr.bf16.mxu0 0
    %1148 = vmatpush1.bf16.xpose.msra.mxu0 %v1122
    %1149 = vmatprep.subr.bf16.mxu0 0
    %1150 = vmatpush2.bf16.xpose.msra.mxu0 0
    %1151 = vmatprep.subr.bf16.mxu0 0
    %1152 = vmatpush2.bf16.xpose.msra.mxu0 0
    %1153 = vmatprep.subr.bf16.mxu0 0
    %1154 = vmatpush2.bf16.xpose.msra.mxu0 0
    %1155 = vmatprep.subr.bf16.mxu0 0
    %1156 = vmatpush2.bf16.xpose.msra.mxu0 0
    %1157 = vmatprep.subr.bf16.mxu0 0
    %1158 = vmatpush2.bf16.xpose.msra.mxu0 0
    %1159 = vmatprep.subr.bf16.mxu0 0
    %1160 = vmatpush2.bf16.xpose.msra.mxu0 0
    %1161 = vmatprep.subr.bf16.mxu0 0
    %1162 = vmatpush2.bf16.xpose.msra.mxu0 0
    %1163 = vmatprep.subr.bf16.mxu0 0
    %1164 = vmatpush2.bf16.xpose.msra.mxu0 0
    %1165 = vmatprep.mubr.bf16.mxu0 0
    %1166 = vmatmul.mubr.bf16.gmra.mxu0 %v1110
    %v1167 = vpop.f32.mrf.mxu0
    %v1168 = vadd.f32 0.0, %v1167
    %v1169 = vpop.f32.mrf.mxu0
    %v1170 = vpop.f32.mrf.mxu0
    %v1171 = vadd.f32 0.0, %v1170
    %v1172 = vpop.f32.mrf.mxu0
    %1173 = vmatprep.mubr.bf16.mxu0 0
    %1174 = vmatmul.mubr.bf16.gmra.mxu0 %v1113
    %v1175 = vpop.f32.mrf.mxu0
    %v1176 = vadd.f32 0.0, %v1175
    %v1177 = vpop.f32.mrf.mxu0
    %v1178 = vpop.f32.mrf.mxu0
    %v1179 = vadd.f32 0.0, %v1178
    %v1180 = vpop.f32.mrf.mxu0
    %1181 = vmatprep.mubr.bf16.mxu0 0
    %1182 = vmatmul.mubr.bf16.gmra.mxu0 %v1116
    %v1183 = vpop.f32.mrf.mxu0
    %v1184 = vadd.f32 0.0, %v1183
    %v1185 = vpop.f32.mrf.mxu0
    %v1186 = vpop.f32.mrf.mxu0
    %v1187 = vadd.f32 0.0, %v1186
    %v1188 = vpop.f32.mrf.mxu0
    %1189 = vmatprep.mubr.bf16.mxu0 0
    %1190 = vmatmul.mubr.bf16.gmra.mxu0 %v1119
    %v1191 = vpop.f32.mrf.mxu0
    %v1192 = vadd.f32 0.0, %v1191
    %v1193 = vpop.f32.mrf.mxu0
    %v1194 = vpop.f32.mrf.mxu0
    %v1195 = vadd.f32 0.0, %v1194
    %v1196 = vpop.f32.mrf.mxu0
    %1197 = vdwg.mxu0
    %v1198 = vsel %vm179, %v1168, -inf
    %1199 = vmax.xlane.f32.xlu0 %v1198
    %v1200 = vpop.xlane.xlu0 %1199
    %v1201 = vsel %vm179, %v1171, -inf
    %1202 = vmax.xlane.f32.xlu0 %v1201
    %v1203 = vpop.xlane.xlu0 %1202
    %v1204 = vsel %vm179, %v1176, -inf
    %1205 = vmax.xlane.f32.xlu0 %v1204
    %v1206 = vpop.xlane.xlu0 %1205
    %v1207 = vsel %vm179, %v1179, -inf
    %1208 = vmax.xlane.f32.xlu0 %v1207
    %v1209 = vpop.xlane.xlu0 %1208
    %v1210 = vsel %vm179, %v1184, -inf
    %1211 = vmax.xlane.f32.xlu0 %v1210
    %v1212 = vpop.xlane.xlu0 %1211
    %v1213 = vsel %vm179, %v1187, -inf
    %1214 = vmax.xlane.f32.xlu0 %v1213
    %v1215 = vpop.xlane.xlu0 %1214
    %v1216 = vsel %vm179, %v1192, -inf
    %1217 = vmax.xlane.f32.xlu0 %v1216
    %v1218 = vpop.xlane.xlu0 %1217
    %v1219 = vsel %vm179, %v1195, -inf
    %1220 = vmax.xlane.f32.xlu0 %v1219
    %v1221 = vpop.xlane.xlu0 %1220
    %v1222 = vsub.f32 %v1168, %v1200
    %v1223 = vsub.f32 %v1171, %v1203
    %v1224 = vsub.f32 %v1176, %v1206
    %v1225 = vsub.f32 %v1179, %v1209
    %v1226 = vsub.f32 %v1184, %v1212
    %v1227 = vsub.f32 %v1187, %v1215
    %v1228 = vsub.f32 %v1192, %v1218
    %v1229 = vsub.f32 %v1195, %v1221
    %v1230 = vmul.f32 %v1222, 1.442695
    %v1231 = vpow.pop %v1230
    %v1232 = vmul.f32 %v1223, 1.442695
    %v1233 = vpow.pop %v1232
    %v1234 = vmul.f32 %v1224, 1.442695
    %v1235 = vpow.pop %v1234
    %v1236 = vmul.f32 %v1225, 1.442695
    %v1237 = vpow.pop %v1236
    %v1238 = vmul.f32 %v1226, 1.442695
    %v1239 = vpow.pop %v1238
    %v1240 = vmul.f32 %v1227, 1.442695
    %v1241 = vpow.pop %v1240
    %v1242 = vmul.f32 %v1228, 1.442695
    %v1243 = vpow.pop %v1242
    %v1244 = vmul.f32 %v1229, 1.442695
    %v1245 = vpow.pop %v1244
    %v1246 = vsel %vm179, %v1231, 0.0
    %1247 = vadd.xlane.f32.xlu0 %v1246
    %v1248 = vpop.xlane.xlu0 %1247
    %v1249 = vsel %vm179, %v1233, 0.0
    %1250 = vadd.xlane.f32.xlu0 %v1249
    %v1251 = vpop.xlane.xlu0 %1250
    %v1252 = vsel %vm179, %v1235, 0.0
    %1253 = vadd.xlane.f32.xlu0 %v1252
    %v1254 = vpop.xlane.xlu0 %1253
    %v1255 = vsel %vm179, %v1237, 0.0
    %1256 = vadd.xlane.f32.xlu0 %v1255
    %v1257 = vpop.xlane.xlu0 %1256
    %v1258 = vsel %vm179, %v1239, 0.0
    %1259 = vadd.xlane.f32.xlu0 %v1258
    %v1260 = vpop.xlane.xlu0 %1259
    %v1261 = vsel %vm179, %v1241, 0.0
    %1262 = vadd.xlane.f32.xlu0 %v1261
    %v1263 = vpop.xlane.xlu0 %1262
    %v1264 = vsel %vm179, %v1243, 0.0
    %1265 = vadd.xlane.f32.xlu0 %v1264
    %v1266 = vpop.xlane.xlu0 %1265
    %v1267 = vsel %vm179, %v1245, 0.0
    %1268 = vadd.xlane.f32.xlu0 %v1267
    %v1269 = vpop.xlane.xlu0 %1268
    %v1270 = vrcp.pop %v1248
    %v1271 = vrcp.pop %v1251
    %v1272 = vrcp.pop %v1254
    %v1273 = vrcp.pop %v1257
    %v1274 = vrcp.pop %v1260
    %v1275 = vrcp.pop %v1263
    %v1276 = vrcp.pop %v1266
    %v1277 = vrcp.pop %v1269
    %v1278 = vmul.f32 %v1231, %v1270
    %v1279 = vmul.f32 %v1233, %v1271
    %v1280 = vmul.f32 %v1235, %v1272
    %v1281 = vmul.f32 %v1237, %v1273
    %v1282 = vmul.f32 %v1239, %v1274
    %v1283 = vmul.f32 %v1241, %v1275
    %v1284 = vmul.f32 %v1243, %v1276
    %v1285 = vmul.f32 %v1245, %v1277
    %v1286 = vpack.c.bf16 %v1279, %v1278
    %v1287 = vpack.c.bf16 %v1281, %v1280
    %v1288 = vpack.c.bf16 %v1283, %v1282
    %v1289 = vpack.c.bf16 %v1285, %v1284
    %v1291 = vsel %vm179, %v1286, 0
    %v1294 = vsel %vm179, %v1287, 0
    %v1297 = vsel %vm179, %v1288, 0
    %v1300 = vsel %vm179, %v1289, 0
    %1302 = vmatprep.subr.bf16.mxu0 0
    %1303 = vmatpush1.bf16.msra.mxu0 0
    %1304 = vmatprep.subr.bf16.mxu0 0
    %1305 = vmatpush1.bf16.msra.mxu0 0
    %1306 = vmatprep.subr.bf16.mxu0 0
    %1307 = vmatpush1.bf16.msra.mxu0 0
    %1308 = vmatprep.subr.bf16.mxu0 0
    %1309 = vmatpush1.bf16.msra.mxu0 0
    %1310 = vmatprep.subr.bf16.mxu0 0
    %1311 = vmatpush1.bf16.msra.mxu0 %v588
    %1312 = vmatprep.subr.bf16.mxu0 0
    %1313 = vmatpush1.bf16.msra.mxu0 %v587
    %1314 = vmatprep.subr.bf16.mxu0 0
    %1315 = vmatpush1.bf16.msra.mxu0 %v586
    %1316 = vmatprep.subr.bf16.mxu0 0
    %1317 = vmatpush1.bf16.msra.mxu0 %v585
    %1318 = vmatprep.subr.bf16.mxu0 0
    %1319 = vmatpush2.bf16.msra.mxu0 0
    %1320 = vmatprep.subr.bf16.mxu0 0
    %1321 = vmatpush2.bf16.msra.mxu0 0
    %1322 = vmatprep.subr.bf16.mxu0 0
    %1323 = vmatpush2.bf16.msra.mxu0 0
    %1324 = vmatprep.subr.bf16.mxu0 0
    %1325 = vmatpush2.bf16.msra.mxu0 0
    %1326 = vmatprep.subr.bf16.mxu0 0
    %1327 = vmatpush2.bf16.msra.mxu0 0
    %1328 = vmatprep.subr.bf16.mxu0 0
    %1329 = vmatpush2.bf16.msra.mxu0 0
    %1330 = vmatprep.subr.bf16.mxu0 0
    %1331 = vmatpush2.bf16.msra.mxu0 0
    %1332 = vmatprep.subr.bf16.mxu0 0
    %1333 = vmatpush2.bf16.msra.mxu0 0
    %1334 = vmatprep.mubr.bf16.mxu0 0
    %1335 = vmatmul.mubr.bf16.gmra.mxu0 %v1291
    %v1336 = vpop.f32.mrf.mxu0
    %v1337 = vadd.f32 0.0, %v1336
    %v1338 = vpop.f32.mrf.mxu0
    %v1339 = vpop.f32.mrf.mxu0
    %v1340 = vadd.f32 0.0, %v1339
    %v1341 = vpop.f32.mrf.mxu0
    %1342 = vmatprep.mubr.bf16.mxu0 0
    %1343 = vmatmul.mubr.bf16.gmra.mxu0 %v1294
    %v1344 = vpop.f32.mrf.mxu0
    %v1345 = vadd.f32 0.0, %v1344
    %v1346 = vpop.f32.mrf.mxu0
    %v1347 = vpop.f32.mrf.mxu0
    %v1348 = vadd.f32 0.0, %v1347
    %v1349 = vpop.f32.mrf.mxu0
    %1350 = vmatprep.mubr.bf16.mxu0 0
    %1351 = vmatmul.mubr.bf16.gmra.mxu0 %v1297
    %v1352 = vpop.f32.mrf.mxu0
    %v1353 = vadd.f32 0.0, %v1352
    %v1354 = vpop.f32.mrf.mxu0
    %v1355 = vpop.f32.mrf.mxu0
    %v1356 = vadd.f32 0.0, %v1355
    %v1357 = vpop.f32.mrf.mxu0
    %1358 = vmatprep.mubr.bf16.mxu0 0
    %1359 = vmatmul.mubr.bf16.gmra.mxu0 %v1300
    %v1360 = vpop.f32.mrf.mxu0
    %v1361 = vadd.f32 0.0, %v1360
    %v1362 = vpop.f32.mrf.mxu0
    %v1363 = vpop.f32.mrf.mxu0
    %v1364 = vadd.f32 0.0, %v1363
    %v1365 = vpop.f32.mrf.mxu0
    %1366 = vdwg.mxu0
    %1367 = vxpose.xlu0.c.b16.start [1/8] %v136, 128
    %1368 = vxpose.xlu0.c.b16.cont [2/8] %v137, 128
    %1369 = vxpose.xlu0.c.b16.cont [3/8] %v138, 128
    %1370 = vxpose.xlu0.c.b16.cont [4/8] %v139, 128
    %1371 = vxpose.xlu0.c.b16.cont [5/8] 0, 128
    %1372 = vxpose.xlu0.c.b16.cont [6/8] 0, 128
    %1373 = vxpose.xlu0.c.b16.cont [7/8] 0, 128
    %1374 = vxpose.xlu0.c.b16.end [8/8] 0, 128
    %v1375 = vpop.trf.xlu0
    %v1376 = vpop.trf.xlu0
    %v1377 = vpop.trf.xlu0
    %v1378 = vpop.trf.xlu0
    %v1379 = vpop.trf.xlu0
    %v1380 = vpop.trf.xlu0
    %v1381 = vpop.trf.xlu0
    %v1382 = vpop.trf.xlu0
    %v1384 = vsel %vm179, %v1375, 0
    %v1387 = vsel %vm179, %v1376, 0
    %v1390 = vsel %vm179, %v1377, 0
    %v1393 = vsel %vm179, %v1378, 0
    %1395 = vmatprep.subr.bf16.mxu0 0
    %1396 = vmatpush1.bf16.msra.mxu0 0
    %1397 = vmatprep.subr.bf16.mxu0 0
    %1398 = vmatpush1.bf16.msra.mxu0 0
    %1399 = vmatprep.subr.bf16.mxu0 0
    %1400 = vmatpush1.bf16.msra.mxu0 0
    %1401 = vmatprep.subr.bf16.mxu0 0
    %1402 = vmatpush1.bf16.msra.mxu0 0
    %1403 = vmatprep.subr.bf16.mxu0 0
    %1404 = vmatpush1.bf16.msra.mxu0 %v139
    %1405 = vmatprep.subr.bf16.mxu0 0
    %1406 = vmatpush1.bf16.msra.mxu0 %v138
    %1407 = vmatprep.subr.bf16.mxu0 0
    %1408 = vmatpush1.bf16.msra.mxu0 %v137
    %1409 = vmatprep.subr.bf16.mxu0 0
    %1410 = vmatpush1.bf16.msra.mxu0 %v136
    %1411 = vmatprep.subr.bf16.mxu0 0
    %1412 = vmatpush2.bf16.msra.mxu0 0
    %1413 = vmatprep.subr.bf16.mxu0 0
    %1414 = vmatpush2.bf16.msra.mxu0 0
    %1415 = vmatprep.subr.bf16.mxu0 0
    %1416 = vmatpush2.bf16.msra.mxu0 0
    %1417 = vmatprep.subr.bf16.mxu0 0
    %1418 = vmatpush2.bf16.msra.mxu0 0
    %1419 = vmatprep.subr.bf16.mxu0 0
    %1420 = vmatpush2.bf16.msra.mxu0 0
    %1421 = vmatprep.subr.bf16.mxu0 0
    %1422 = vmatpush2.bf16.msra.mxu0 0
    %1423 = vmatprep.subr.bf16.mxu0 0
    %1424 = vmatpush2.bf16.msra.mxu0 0
    %1425 = vmatprep.subr.bf16.mxu0 0
    %1426 = vmatpush2.bf16.msra.mxu0 0
    %1427 = vmatprep.mubr.bf16.mxu0 0
    %1428 = vmatmul.mubr.bf16.gmra.mxu0 %v1384
    %v1429 = vpop.f32.mrf.mxu0
    %v1430 = vadd.f32 0.0, %v1429
    %v1431 = vpop.f32.mrf.mxu0
    %v1432 = vpop.f32.mrf.mxu0
    %v1433 = vadd.f32 0.0, %v1432
    %v1434 = vpop.f32.mrf.mxu0
    %1435 = vmatprep.mubr.bf16.mxu0 0
    %1436 = vmatmul.mubr.bf16.gmra.mxu0 %v1387
    %v1437 = vpop.f32.mrf.mxu0
    %v1438 = vadd.f32 0.0, %v1437
    %v1439 = vpop.f32.mrf.mxu0
    %v1440 = vpop.f32.mrf.mxu0
    %v1441 = vadd.f32 0.0, %v1440
    %v1442 = vpop.f32.mrf.mxu0
    %1443 = vmatprep.mubr.bf16.mxu0 0
    %1444 = vmatmul.mubr.bf16.gmra.mxu0 %v1390
    %v1445 = vpop.f32.mrf.mxu0
    %v1446 = vadd.f32 0.0, %v1445
    %v1447 = vpop.f32.mrf.mxu0
    %v1448 = vpop.f32.mrf.mxu0
    %v1449 = vadd.f32 0.0, %v1448
    %v1450 = vpop.f32.mrf.mxu0
    %1451 = vmatprep.mubr.bf16.mxu0 0
    %1452 = vmatmul.mubr.bf16.gmra.mxu0 %v1393
    %v1453 = vpop.f32.mrf.mxu0
    %v1454 = vadd.f32 0.0, %v1453
    %v1455 = vpop.f32.mrf.mxu0
    %v1456 = vpop.f32.mrf.mxu0
    %v1457 = vadd.f32 0.0, %v1456
    %v1458 = vpop.f32.mrf.mxu0
    %1459 = vdwg.mxu0
    %v1460 = vsel %vm179, %v1430, -inf
    %v1461 = vsel %vm179, %v1433, -inf
    %v1462 = vsel %vm179, %v1438, -inf
    %v1463 = vsel %vm179, %v1441, -inf
    %v1464 = vsel %vm179, %v1446, -inf
    %v1465 = vmax.f32 %v1460, %v1464
    %v1466 = vsel %vm179, %v1449, -inf
    %v1467 = vmax.f32 %v1461, %v1466
    %v1468 = vsel %vm179, %v1454, -inf
    %v1469 = vmax.f32 %v1462, %v1468
    %v1470 = vsel %vm179, %v1457, -inf
    %v1471 = vmax.f32 %v1463, %v1470
    %v1472 = vmax.f32 %v1465, %v1467
    %v1473 = vmax.f32 %v1469, %v1471
    %v1474 = vmax.f32 %v1472, %v1473
    %v1475 = vrot.slane %v1474, 4
    %v1476 = vmax.f32 %v1474, %v1475
    %v1477 = vrot.slane %v1476, 2
    %v1478 = vmax.f32 %v1476, %v1477
    %v1479 = vrot.slane %v1478, 1
    %v1480 = vmax.f32 %v1478, %v1479
    %v1481 = vsub.f32 %v1430, %v1480
    %v1482 = vsub.f32 %v1433, %v1480
    %v1483 = vsub.f32 %v1438, %v1480
    %v1484 = vsub.f32 %v1441, %v1480
    %v1485 = vsub.f32 %v1446, %v1480
    %v1486 = vsub.f32 %v1449, %v1480
    %v1487 = vsub.f32 %v1454, %v1480
    %v1488 = vsub.f32 %v1457, %v1480
    %v1489 = vmul.f32 %v1481, 1.442695
    %v1490 = vpow.pop %v1489
    %v1491 = vmul.f32 %v1482, 1.442695
    %v1492 = vpow.pop %v1491
    %v1493 = vmul.f32 %v1483, 1.442695
    %v1494 = vpow.pop %v1493
    %v1495 = vmul.f32 %v1484, 1.442695
    %v1496 = vpow.pop %v1495
    %v1497 = vmul.f32 %v1485, 1.442695
    %v1498 = vpow.pop %v1497
    %v1499 = vmul.f32 %v1486, 1.442695
    %v1500 = vpow.pop %v1499
    %v1501 = vmul.f32 %v1487, 1.442695
    %v1502 = vpow.pop %v1501
    %v1503 = vmul.f32 %v1488, 1.442695
    %v1504 = vpow.pop %v1503
    %v1505 = vsel %vm179, %v1490, 0.0
    %v1506 = vsel %vm179, %v1492, 0.0
    %v1507 = vadd.f32 %v1505, %v1506
    %v1508 = vsel %vm179, %v1494, 0.0
    %v1509 = vadd.f32 %v1507, %v1508
    %v1510 = vsel %vm179, %v1496, 0.0
    %v1511 = vadd.f32 %v1509, %v1510
    %v1512 = vsel %vm179, %v1498, 0.0
    %v1513 = vadd.f32 %v1511, %v1512
    %v1514 = vsel %vm179, %v1500, 0.0
    %v1515 = vadd.f32 %v1513, %v1514
    %v1516 = vsel %vm179, %v1502, 0.0
    %v1517 = vadd.f32 %v1515, %v1516
    %v1518 = vsel %vm179, %v1504, 0.0
    %v1519 = vadd.f32 %v1517, %v1518
    %v1520 = vrot.slane %v1519, 4
    %v1521 = vadd.f32 %v1519, %v1520
    %v1522 = vrot.slane %v1521, 2
    %v1523 = vadd.f32 %v1521, %v1522
    %v1524 = vrot.slane %v1523, 1
    %v1525 = vadd.f32 %v1523, %v1524
    %v1526 = vrcp.pop %v1525
    %v1527 = vmul.f32 %v1490, %v1526
    %v1528 = vmul.f32 %v1492, %v1526
    %v1529 = vmul.f32 %v1494, %v1526
    %v1530 = vmul.f32 %v1496, %v1526
    %v1531 = vmul.f32 %v1498, %v1526
    %v1532 = vmul.f32 %v1500, %v1526
    %v1533 = vmul.f32 %v1502, %v1526
    %v1534 = vmul.f32 %v1504, %v1526
    %v1535 = vpack.c.bf16 %v1528, %v1527
    %v1536 = vpack.c.bf16 %v1530, %v1529
    %v1537 = vpack.c.bf16 %v1532, %v1531
    %v1538 = vpack.c.bf16 %v1534, %v1533
    %1539 = vmatprep.subr.bf16.mxu0 0
    %1540 = vmatpush1.bf16.msra.mxu0 0
    %1541 = vmatprep.subr.bf16.mxu0 0
    %1542 = vmatpush1.bf16.msra.mxu0 0
    %1543 = vmatprep.subr.bf16.mxu0 0
    %1544 = vmatpush1.bf16.msra.mxu0 0
    %1545 = vmatprep.subr.bf16.mxu0 0
    %1546 = vmatpush1.bf16.msra.mxu0 0
    %1547 = vmatprep.subr.bf16.mxu0 0
    %1548 = vmatpush1.bf16.msra.mxu0 %v1538
    %1549 = vmatprep.subr.bf16.mxu0 0
    %1550 = vmatpush1.bf16.msra.mxu0 %v1537
    %1551 = vmatprep.subr.bf16.mxu0 0
    %1552 = vmatpush1.bf16.msra.mxu0 %v1536
    %1553 = vmatprep.subr.bf16.mxu0 0
    %1554 = vmatpush1.bf16.msra.mxu0 %v1535
    %1555 = vmatprep.subr.bf16.mxu0 0
    %1556 = vmatpush2.bf16.msra.mxu0 0
    %1557 = vmatprep.subr.bf16.mxu0 0
    %1558 = vmatpush2.bf16.msra.mxu0 0
    %1559 = vmatprep.subr.bf16.mxu0 0
    %1560 = vmatpush2.bf16.msra.mxu0 0
    %1561 = vmatprep.subr.bf16.mxu0 0
    %1562 = vmatpush2.bf16.msra.mxu0 0
    %1563 = vmatprep.subr.bf16.mxu0 0
    %1564 = vmatpush2.bf16.msra.mxu0 0
    %1565 = vmatprep.subr.bf16.mxu0 0
    %1566 = vmatpush2.bf16.msra.mxu0 0
    %1567 = vmatprep.subr.bf16.mxu0 0
    %1568 = vmatpush2.bf16.msra.mxu0 0
    %1569 = vmatprep.subr.bf16.mxu0 0
    %1570 = vmatpush2.bf16.msra.mxu0 0
    %1571 = vmatprep.mubr.bf16.mxu0 0
    %1572 = vmatmul.mubr.bf16.gmra.mxu0 %v193
    %v1573 = vpop.f32.mrf.mxu0
    %v1574 = vadd.f32 0.0, %v1573
    %v1575 = vpop.f32.mrf.mxu0
    %v1576 = vpop.f32.mrf.mxu0
    %v1577 = vadd.f32 0.0, %v1576
    %v1578 = vpop.f32.mrf.mxu0
    %1579 = vmatprep.mubr.bf16.mxu0 0
    %1580 = vmatmul.mubr.bf16.gmra.mxu0 %v196
    %v1581 = vpop.f32.mrf.mxu0
    %v1582 = vadd.f32 0.0, %v1581
    %v1583 = vpop.f32.mrf.mxu0
    %v1584 = vpop.f32.mrf.mxu0
    %v1585 = vadd.f32 0.0, %v1584
    %v1586 = vpop.f32.mrf.mxu0
    %1587 = vmatprep.mubr.bf16.mxu0 0
    %1588 = vmatmul.mubr.bf16.gmra.mxu0 %v199
    %v1589 = vpop.f32.mrf.mxu0
    %v1590 = vadd.f32 0.0, %v1589
    %v1591 = vpop.f32.mrf.mxu0
    %v1592 = vpop.f32.mrf.mxu0
    %v1593 = vadd.f32 0.0, %v1592
    %v1594 = vpop.f32.mrf.mxu0
    %1595 = vmatprep.mubr.bf16.mxu0 0
    %1596 = vmatmul.mubr.bf16.gmra.mxu0 %v202
    %v1597 = vpop.f32.mrf.mxu0
    %v1598 = vadd.f32 0.0, %v1597
    %v1599 = vpop.f32.mrf.mxu0
    %v1600 = vpop.f32.mrf.mxu0
    %v1601 = vadd.f32 0.0, %v1600
    %v1602 = vpop.f32.mrf.mxu0
    %1603 = vdwg.mxu0
    %v1604 = vpack.c.bf16 %v833, %v830
    %v1605 = vpack.c.bf16 %v841, %v838
    %v1606 = vpack.c.bf16 %v849, %v846
    %v1607 = vpack.c.bf16 %v857, %v854
    %v1608 = vpack.c.bf16 %v1340, %v1337
    %v1609 = vpack.c.bf16 %v1348, %v1345
    %v1610 = vpack.c.bf16 %v1356, %v1353
    %v1611 = vpack.c.bf16 %v1364, %v1361
    %v1612 = vld [vmem:[#allocation10] sm:$0xf]
    %v1613 = vld [vmem:[#allocation10 + $0x4] sm:$0xf]
    %v1614 = vld [vmem:[#allocation10 + $0x8] sm:$0xf]
    %v1615 = vld [vmem:[#allocation10 + $0xc] sm:$0xf]
    %v1616 = vld [vmem:[#allocation10 + $0x10] sm:$0xf]
    %v1617 = vld [vmem:[#allocation10 + $0x14] sm:$0xf]
    %v1618 = vld [vmem:[#allocation10 + $0x18] sm:$0xf]
    %v1619 = vld [vmem:[#allocation10 + $0x1c] sm:$0xf]
    %v1620 = vpack.c.bf16 %v1070, %v1067
    %v1621 = vpack.c.bf16 %v1078, %v1075
    %v1622 = vpack.c.bf16 %v1086, %v1083
    %v1623 = vpack.c.bf16 %v1094, %v1091
    %v1624 = vpack.c.bf16 %v1577, %v1574
    %v1625 = vpack.c.bf16 %v1585, %v1582
    %v1626 = vpack.c.bf16 %v1593, %v1590
    %v1627 = vpack.c.bf16 %v1601, %v1598
    %v1628 = vld [vmem:[#allocation11] sm:$0xf]
    %v1629 = vld [vmem:[#allocation11 + $0x4] sm:$0xf]
    %v1630 = vld [vmem:[#allocation11 + $0x8] sm:$0xf]
    %v1631 = vld [vmem:[#allocation11 + $0xc] sm:$0xf]
    %v1632 = vld [vmem:[#allocation11 + $0x10] sm:$0xf]
    %v1633 = vld [vmem:[#allocation11 + $0x14] sm:$0xf]
    %v1634 = vld [vmem:[#allocation11 + $0x18] sm:$0xf]
    %v1635 = vld [vmem:[#allocation11 + $0x1c] sm:$0xf]
    %v1644 = vunpack.c.l.b16 %v1628
    %v1645 = vunpack.c.l.b16 %v1629
    %v1646 = vunpack.c.l.b16 %v1630
    %v1647 = vunpack.c.l.b16 %v1631
    %v1648 = vunpack.c.l.b16 %v1632
    %v1649 = vunpack.c.l.b16 %v1633
    %v1650 = vunpack.c.l.b16 %v1634
    %v1651 = vunpack.c.l.b16 %v1635
    %v1652 = vpack.c.b16 %v1645, %v1644
    %v1653 = vpack.c.b16 %v1647, %v1646
    %v1654 = vpack.c.b16 %v1649, %v1648
    %v1655 = vpack.c.b16 %v1651, %v1650
    %v1661 = vsel %vm179, %v1620, 0
    %v1664 = vsel %vm179, %v1621, 0
    %v1667 = vsel %vm179, %v1622, 0
    %v1670 = vsel %vm179, %v1623, 0
    %v1673 = vsel %vm179, %v1624, 0
    %v1676 = vsel %vm179, %v1625, 0
    %v1679 = vsel %vm179, %v1626, 0
    %v1682 = vsel %vm179, %v1627, 0
    %1684 = vmatprep.subr.bf16.mxu0 0
    %1685 = vmatpush1.bf16.msra.mxu0 0
    %1686 = vmatprep.subr.bf16.mxu0 0
    %1687 = vmatpush1.bf16.msra.mxu0 0
    %1688 = vmatprep.subr.bf16.mxu0 0
    %1689 = vmatpush1.bf16.msra.mxu0 0
    %1690 = vmatprep.subr.bf16.mxu0 0
    %1691 = vmatpush1.bf16.msra.mxu0 0
    %1692 = vmatprep.subr.bf16.mxu0 0
    %1693 = vmatpush1.bf16.msra.mxu0 %v1655
    %1694 = vmatprep.subr.bf16.mxu0 0
    %1695 = vmatpush1.bf16.msra.mxu0 %v1654
    %1696 = vmatprep.subr.bf16.mxu0 0
    %1697 = vmatpush1.bf16.msra.mxu0 %v1653
    %1698 = vmatprep.subr.bf16.mxu0 0
    %1699 = vmatpush1.bf16.msra.mxu0 %v1652
    %1700 = vmatprep.subr.bf16.mxu0 0
    %1701 = vmatpush2.bf16.msra.mxu0 0
    %1702 = vmatprep.subr.bf16.mxu0 0
    %1703 = vmatpush2.bf16.msra.mxu0 0
    %1704 = vmatprep.subr.bf16.mxu0 0
    %1705 = vmatpush2.bf16.msra.mxu0 0
    %1706 = vmatprep.subr.bf16.mxu0 0
    %1707 = vmatpush2.bf16.msra.mxu0 0
    %1708 = vmatprep.subr.bf16.mxu0 0
    %1709 = vmatpush2.bf16.msra.mxu0 0
    %1710 = vmatprep.subr.bf16.mxu0 0
    %1711 = vmatpush2.bf16.msra.mxu0 0
    %1712 = vmatprep.subr.bf16.mxu0 0
    %1713 = vmatpush2.bf16.msra.mxu0 0
    %1714 = vmatprep.subr.bf16.mxu0 0
    %1715 = vmatpush2.bf16.msra.mxu0 0
    %1716 = vmatprep.mubr.bf16.mxu0 0
    %1717 = vmatmul.mubr.bf16.gmra.mxu0 %v1661
    %v1718 = vpop.f32.mrf.mxu0
    %v1719 = vadd.f32 0.0, %v1718
    %v1720 = vpop.f32.mrf.mxu0
    %v1721 = vpop.f32.mrf.mxu0
    %v1722 = vadd.f32 0.0, %v1721
    %v1723 = vpop.f32.mrf.mxu0
    %1724 = vmatprep.mubr.bf16.mxu0 0
    %1725 = vmatmul.mubr.bf16.gmra.mxu0 %v1664
    %v1726 = vpop.f32.mrf.mxu0
    %v1727 = vadd.f32 0.0, %v1726
    %v1728 = vpop.f32.mrf.mxu0
    %v1729 = vpop.f32.mrf.mxu0
    %v1730 = vadd.f32 0.0, %v1729
    %v1731 = vpop.f32.mrf.mxu0
    %1732 = vmatprep.mubr.bf16.mxu0 0
    %1733 = vmatmul.mubr.bf16.gmra.mxu0 %v1667
    %v1734 = vpop.f32.mrf.mxu0
    %v1735 = vadd.f32 0.0, %v1734
    %v1736 = vpop.f32.mrf.mxu0
    %v1737 = vpop.f32.mrf.mxu0
    %v1738 = vadd.f32 0.0, %v1737
    %v1739 = vpop.f32.mrf.mxu0
    %1740 = vmatprep.mubr.bf16.mxu0 0
    %1741 = vmatmul.mubr.bf16.gmra.mxu0 %v1670
    %v1742 = vpop.f32.mrf.mxu0
    %v1743 = vadd.f32 0.0, %v1742
    %v1744 = vpop.f32.mrf.mxu0
    %v1745 = vpop.f32.mrf.mxu0
    %v1746 = vadd.f32 0.0, %v1745
    %v1747 = vpop.f32.mrf.mxu0
    %1748 = vmatprep.mubr.bf16.mxu0 0
    %1749 = vmatmul.mubr.bf16.gmra.mxu0 %v1673
    %v1750 = vpop.f32.mrf.mxu0
    %v1751 = vadd.f32 0.0, %v1750
    %v1752 = vpop.f32.mrf.mxu0
    %v1753 = vpop.f32.mrf.mxu0
    %v1754 = vadd.f32 0.0, %v1753
    %v1755 = vpop.f32.mrf.mxu0
    %1756 = vmatprep.mubr.bf16.mxu0 0
    %1757 = vmatmul.mubr.bf16.gmra.mxu0 %v1676
    %v1758 = vpop.f32.mrf.mxu0
    %v1759 = vadd.f32 0.0, %v1758
    %v1760 = vpop.f32.mrf.mxu0
    %v1761 = vpop.f32.mrf.mxu0
    %v1762 = vadd.f32 0.0, %v1761
    %v1763 = vpop.f32.mrf.mxu0
    %1764 = vmatprep.mubr.bf16.mxu0 0
    %1765 = vmatmul.mubr.bf16.gmra.mxu0 %v1679
    %v1766 = vpop.f32.mrf.mxu0
    %v1767 = vadd.f32 0.0, %v1766
    %v1768 = vpop.f32.mrf.mxu0
    %v1769 = vpop.f32.mrf.mxu0
    %v1770 = vadd.f32 0.0, %v1769
    %v1771 = vpop.f32.mrf.mxu0
    %1772 = vmatprep.mubr.bf16.mxu0 0
    %1773 = vmatmul.mubr.bf16.gmra.mxu0 %v1682
    %v1774 = vpop.f32.mrf.mxu0
    %v1775 = vadd.f32 0.0, %v1774
    %v1776 = vpop.f32.mrf.mxu0
    %v1777 = vpop.f32.mrf.mxu0
    %v1778 = vadd.f32 0.0, %v1777
    %v1779 = vpop.f32.mrf.mxu0
    %1780 = vdwg.mxu0
    %v1789 = vunpack.c.l.b16 %v1612
    %v1790 = vunpack.c.l.b16 %v1613
    %v1791 = vunpack.c.l.b16 %v1614
    %v1792 = vunpack.c.l.b16 %v1615
    %v1793 = vunpack.c.l.b16 %v1616
    %v1794 = vunpack.c.l.b16 %v1617
    %v1795 = vunpack.c.l.b16 %v1618
    %v1796 = vunpack.c.l.b16 %v1619
    %v1797 = vpack.c.b16 %v1790, %v1789
    %v1798 = vpack.c.b16 %v1792, %v1791
    %v1799 = vpack.c.b16 %v1794, %v1793
    %v1800 = vpack.c.b16 %v1796, %v1795
    %v1806 = vsel %vm179, %v1604, 0
    %v1809 = vsel %vm179, %v1605, 0
    %v1812 = vsel %vm179, %v1606, 0
    %v1815 = vsel %vm179, %v1607, 0
    %v1818 = vsel %vm179, %v1608, 0
    %v1821 = vsel %vm179, %v1609, 0
    %v1824 = vsel %vm179, %v1610, 0
    %v1827 = vsel %vm179, %v1611, 0
    %1829 = vmatprep.subr.bf16.mxu0 0
    %1830 = vmatpush1.bf16.msra.mxu0 0
    %1831 = vmatprep.subr.bf16.mxu0 0
    %1832 = vmatpush1.bf16.msra.mxu0 0
    %1833 = vmatprep.subr.bf16.mxu0 0
    %1834 = vmatpush1.bf16.msra.mxu0 0
    %1835 = vmatprep.subr.bf16.mxu0 0
    %1836 = vmatpush1.bf16.msra.mxu0 0
    %1837 = vmatprep.subr.bf16.mxu0 0
    %1838 = vmatpush1.bf16.msra.mxu0 %v1800
    %1839 = vmatprep.subr.bf16.mxu0 0
    %1840 = vmatpush1.bf16.msra.mxu0 %v1799
    %1841 = vmatprep.subr.bf16.mxu0 0
    %1842 = vmatpush1.bf16.msra.mxu0 %v1798
    %1843 = vmatprep.subr.bf16.mxu0 0
    %1844 = vmatpush1.bf16.msra.mxu0 %v1797
    %1845 = vmatprep.subr.bf16.mxu0 0
    %1846 = vmatpush2.bf16.msra.mxu0 0
    %1847 = vmatprep.subr.bf16.mxu0 0
    %1848 = vmatpush2.bf16.msra.mxu0 0
    %1849 = vmatprep.subr.bf16.mxu0 0
    %1850 = vmatpush2.bf16.msra.mxu0 0
    %1851 = vmatprep.subr.bf16.mxu0 0
    %1852 = vmatpush2.bf16.msra.mxu0 0
    %1853 = vmatprep.subr.bf16.mxu0 0
    %1854 = vmatpush2.bf16.msra.mxu0 0
    %1855 = vmatprep.subr.bf16.mxu0 0
    %1856 = vmatpush2.bf16.msra.mxu0 0
    %1857 = vmatprep.subr.bf16.mxu0 0
    %1858 = vmatpush2.bf16.msra.mxu0 0
    %1859 = vmatprep.subr.bf16.mxu0 0
    %1860 = vmatpush2.bf16.msra.mxu0 0
    %1861 = vmatprep.mubr.bf16.mxu0 0
    %1862 = vmatmul.mubr.bf16.gmra.mxu0 %v1806
    %v1863 = vpop.f32.mrf.mxu0
    %v1864 = vadd.f32 %v1719, %v1863
    %v1865 = vpop.f32.mrf.mxu0
    %v1866 = vpop.f32.mrf.mxu0
    %v1867 = vadd.f32 %v1722, %v1866
    %v1868 = vpop.f32.mrf.mxu0
    %1869 = vmatprep.mubr.bf16.mxu0 0
    %1870 = vmatmul.mubr.bf16.gmra.mxu0 %v1809
    %v1871 = vpop.f32.mrf.mxu0
    %v1872 = vadd.f32 %v1727, %v1871
    %v1873 = vpop.f32.mrf.mxu0
    %v1874 = vpop.f32.mrf.mxu0
    %v1875 = vadd.f32 %v1730, %v1874
    %v1876 = vpop.f32.mrf.mxu0
    %1877 = vmatprep.mubr.bf16.mxu0 0
    %1878 = vmatmul.mubr.bf16.gmra.mxu0 %v1812
    %v1879 = vpop.f32.mrf.mxu0
    %v1880 = vadd.f32 %v1735, %v1879
    %v1881 = vpop.f32.mrf.mxu0
    %v1882 = vpop.f32.mrf.mxu0
    %v1883 = vadd.f32 %v1738, %v1882
    %v1884 = vpop.f32.mrf.mxu0
    %1885 = vmatprep.mubr.bf16.mxu0 0
    %1886 = vmatmul.mubr.bf16.gmra.mxu0 %v1815
    %v1887 = vpop.f32.mrf.mxu0
    %v1888 = vadd.f32 %v1743, %v1887
    %v1889 = vpop.f32.mrf.mxu0
    %v1890 = vpop.f32.mrf.mxu0
    %v1891 = vadd.f32 %v1746, %v1890
    %v1892 = vpop.f32.mrf.mxu0
    %1893 = vmatprep.mubr.bf16.mxu0 0
    %1894 = vmatmul.mubr.bf16.gmra.mxu0 %v1818
    %v1895 = vpop.f32.mrf.mxu0
    %v1896 = vadd.f32 %v1751, %v1895
    %v1897 = vpop.f32.mrf.mxu0
    %v1898 = vpop.f32.mrf.mxu0
    %v1899 = vadd.f32 %v1754, %v1898
    %v1900 = vpop.f32.mrf.mxu0
    %1901 = vmatprep.mubr.bf16.mxu0 0
    %1902 = vmatmul.mubr.bf16.gmra.mxu0 %v1821
    %v1903 = vpop.f32.mrf.mxu0
    %v1904 = vadd.f32 %v1759, %v1903
    %v1905 = vpop.f32.mrf.mxu0
    %v1906 = vpop.f32.mrf.mxu0
    %v1907 = vadd.f32 %v1762, %v1906
    %v1908 = vpop.f32.mrf.mxu0
    %1909 = vmatprep.mubr.bf16.mxu0 0
    %1910 = vmatmul.mubr.bf16.gmra.mxu0 %v1824
    %v1911 = vpop.f32.mrf.mxu0
    %v1912 = vadd.f32 %v1767, %v1911
    %v1913 = vpop.f32.mrf.mxu0
    %v1914 = vpop.f32.mrf.mxu0
    %v1915 = vadd.f32 %v1770, %v1914
    %v1916 = vpop.f32.mrf.mxu0
    %1917 = vmatprep.mubr.bf16.mxu0 0
    %1918 = vmatmul.mubr.bf16.gmra.mxu0 %v1827
    %v1919 = vpop.f32.mrf.mxu0
    %v1920 = vadd.f32 %v1775, %v1919
    %v1921 = vpop.f32.mrf.mxu0
    %v1922 = vpop.f32.mrf.mxu0
    %v1923 = vadd.f32 %v1778, %v1922
    %v1924 = vpop.f32.mrf.mxu0
    %1925 = vdwg.mxu0
    %v1926 = vadd.f32 %v1864, %v511
    %v1927 = vadd.f32 %v1867, %v514
    %v1928 = vadd.f32 %v1872, %v519
    %v1929 = vadd.f32 %v1875, %v522
    %v1930 = vadd.f32 %v1880, %v527
    %v1931 = vadd.f32 %v1883, %v530
    %v1932 = vadd.f32 %v1888, %v535
    %v1933 = vadd.f32 %v1891, %v538
    %v1934 = vadd.f32 %v1896, %v543
    %v1935 = vadd.f32 %v1899, %v546
    %v1936 = vadd.f32 %v1904, %v551
    %v1937 = vadd.f32 %v1907, %v554
    %v1938 = vadd.f32 %v1912, %v559
    %v1939 = vadd.f32 %v1915, %v562
    %v1940 = vadd.f32 %v1920, %v567
    %v1941 = vadd.f32 %v1923, %v570
    %v1942 = vmax.f32 %v1926, 0.0
    %v1943 = vmax.f32 %v1927, 0.0
    %v1944 = vmax.f32 %v1928, 0.0
    %v1945 = vmax.f32 %v1929, 0.0
    %v1946 = vmax.f32 %v1930, 0.0
    %v1947 = vmax.f32 %v1931, 0.0
    %v1948 = vmax.f32 %v1932, 0.0
    %v1949 = vmax.f32 %v1933, 0.0
    %v1950 = vmax.f32 %v1934, 0.0
    %v1951 = vmax.f32 %v1935, 0.0
    %v1952 = vmax.f32 %v1936, 0.0
    %v1953 = vmax.f32 %v1937, 0.0
    %v1954 = vmax.f32 %v1938, 0.0
    %v1955 = vmax.f32 %v1939, 0.0
    %v1956 = vmax.f32 %v1940, 0.0
    %v1957 = vmax.f32 %v1941, 0.0
    %1958 = vst.msk [vmem:[#allocation13] sm:$0xff] %vm179, %v1942
    %1959 = vst.msk [vmem:[#allocation13 + $0x8] sm:$0xff] %vm179, %v1943
    %1960 = vst.msk [vmem:[#allocation13 + $0x10] sm:$0xff] %vm179, %v1944
    %1961 = vst.msk [vmem:[#allocation13 + $0x18] sm:$0xff] %vm179, %v1945
    %1962 = vst.msk [vmem:[#allocation13 + $0x20] sm:$0xff] %vm179, %v1946
    %1963 = vst.msk [vmem:[#allocation13 + $0x28] sm:$0xff] %vm179, %v1947
    %1964 = vst.msk [vmem:[#allocation13 + $0x30] sm:$0xff] %vm179, %v1948
    %1965 = vst.msk [vmem:[#allocation13 + $0x38] sm:$0xff] %vm179, %v1949
    %1966 = vst.msk [vmem:[#allocation13 + $0x40] sm:$0xff] %vm179, %v1950
    %1967 = vst.msk [vmem:[#allocation13 + $0x48] sm:$0xff] %vm179, %v1951
    %1968 = vst.msk [vmem:[#allocation13 + $0x50] sm:$0xff] %vm179, %v1952
    %1969 = vst.msk [vmem:[#allocation13 + $0x58] sm:$0xff] %vm179, %v1953
    %1970 = vst.msk [vmem:[#allocation13 + $0x60] sm:$0xff] %vm179, %v1954
    %1971 = vst.msk [vmem:[#allocation13 + $0x68] sm:$0xff] %vm179, %v1955
    %1972 = vst.msk [vmem:[#allocation13 + $0x70] sm:$0xff] %vm179, %v1956
    %1973 = vst.msk [vmem:[#allocation13 + $0x78] sm:$0xff] %vm179, %v1957
    // Predicated region
    $region62: #{dual_attention_pallas.1} parent=1 // pred_check
      _
    $region63: #{dual_attention_pallas.1} parent=1 // pred_check_branch
      %1975 = sbr.rel (0) target = $region65
    $region64: #{dual_attention_pallas.1} parent=1 // pred_region
      %s1977 = ssub.s32 2048, 2048
      %1978 = vsyncadd [#allocation4], %s1977
      %s1979 = sshll.u32 [#allocation13], 4
      %s1980 = int_to_ptr.vmem [resolvable:$true] %s1979
      %1985 = dma.vmem_to_hbm [thread:$0]  %s1980, 2048, %s9, [#allocation4], 128, 128, 8
    $region65: #{dual_attention_pallas.1} parent=1 // pred_fallthru
      _
    // Predicated region
    $region66: #{dual_attention_pallas.1} parent=1 // pred_check
      _
    $region67: #{dual_attention_pallas.1} parent=1 // pred_check_branch
      %1987 = sbr.rel (0) target = $region69
    $region68: #{dual_attention_pallas.1} parent=1 // pred_region
      %1988 = dma.done [#allocation4], 2048
    $region69: #{dual_attention_pallas.1} parent=1 // pred_fallthru
      _
    %1989 = vsyncpa [#allocation3], 1
    %1990 = vsyncpa [#allocation6], 1
    %1991 = vsyncpa [#allocation9], 1
    %1992 = vsyncpa [#allocation12], 1
    %1993 = vsyncpa [#allocation4], 1

</llo_original>
